<compile_context>
chip_gen: v6e
topology: v6e:2x2x1
jax: 0.10.0
libtpu: 0.0.40
codegen_flags: <defaults>
</compile_context>

<pallas_src>
import numpy as np
import jax
import jax.numpy as jnp
from jax.experimental import pallas as pl
from jax.experimental.pallas import tpu as pltpu

# ----------------------- static model dimensions -----------------------
B = 2              # batch
H = W = 16         # spatial size of the backbone input
HW = H * W
CIN = 3            # image channels
FEAT = 32          # backbone feature dim == SelfAttention dim == LSTM hidden size
MCB = 128          # CompactBilinearPooling output dim (fixed by the module)
K3 = 3             # backbone conv kernel
K7 = 7             # SpatialAttention conv kernel
PATCH = K3 * K3 * CIN          # 27
PATCH_PAD = 32                 # im2col K dim padded to a lane-friendly width


# ---------------------------------------------------------------------------
# Fused kernel: conv+ReLU -> SpatialAttention -> gated avg-pool ->
#               SelfAttention -> biLSTM(seq=1) -> Linear (+folded sketch) ->
#               clinical Linear -> CompactBilinearPooling -> BatchNorm1d ->
#               ReLU -> classifier.
# ---------------------------------------------------------------------------
def make_fused_kernel(h2_0, h2_1):
    def kernel(lhs_ref, clin_ref,
               w3f_ref, b3_ref, convmat_ref, gamma_ref, poolmask_ref,
               wih_ref, bih_ref, wls_ref, bls_ref,
               wcs_ref, bcs_ref, bnw_ref, bnb_ref, wcl_ref, bcl_ref,
               out_ref):
        f32 = jnp.float32

        # ---- backbone Conv2d(3,FEAT,3,pad=1) + ReLU: one im2col MXU matmul.
        # lhs was built lane-dense in the wrapper: (B*H*W, PATCH_PAD).
        y2d = jnp.dot(lhs_ref[...], w3f_ref[...], preferred_element_type=f32) + b3_ref[...]
        y2d = jnp.maximum(y2d, 0.0)                                  # (B*H*W, FEAT)

        # ---- SpatialAttention: channel avg/max -> ONE (B,2HW)x(2HW,HW) matmul -> sigmoid
        m_avg = jnp.mean(y2d, axis=-1, keepdims=True).reshape(B, HW)   # (B, HW)
        m_max = jnp.max(y2d, axis=-1, keepdims=True).reshape(B, HW)    # (B, HW)
        m = jnp.concatenate([m_avg, m_max], axis=-1)                   # (B, 2*HW)
        att = jax.nn.sigmoid(
            jnp.dot(m, convmat_ref[...], preferred_element_type=f32))  # (B, HW)

        # ---- gate + adaptive_avg_pool2d((1,1)) fused into one block-diag matmul:
        # pooled[b,f] = (1/HW) * sum_p att[b,p] * y[b,p,f]
        gate = jnp.concatenate([att] * B, axis=-1) * poolmask_ref[...]   # (B, B*HW)
        pooled = jnp.dot(gate, y2d, preferred_element_type=f32)          # (B, FEAT)

        # ---- SelfAttention: softmax over a length-1 axis == 1 -> (1 + gamma) * x
        x = gamma_ref[...] * pooled + pooled

        # ---- bidirectional single-step LSTM (h0 = c0 = 0), merged [i,g,o] gates ----
        gates = jnp.dot(x, wih_ref[...], preferred_element_type=f32) + bih_ref[...]

        def cell(g):                       # g: (B, 3*FEAT), columns = [i, g, o]
            i_g = jax.nn.sigmoid(g[:, 0:FEAT])
            g_g = jnp.tanh(g[:, FEAT:2 * FEAT])
            o_g = jax.nn.sigmoid(g[:, 2 * FEAT:3 * FEAT])
            return o_g * jnp.tanh(i_g * g_g)                          # c = i*g (c0=0)

        h_f = cell(gates[:, 0:3 * FEAT])
        h_b = cell(gates[:, 3 * FEAT:6 * FEAT])
        lstm_out = jnp.concatenate([h_f, h_b], axis=-1)               # (B, 2*FEAT)

        # ---- Linear(2*FEAT -> 128) with the CBP count-sketch S1 folded in ----------
        sx = jnp.dot(lstm_out, wls_ref[...], preferred_element_type=f32) + bls_ref[...]

        # ---- clinical Linear(2,2) on the VPU (tiny; s2 sign sketch folded in) ------
        clin = clin_ref[...]                                          # (B, 2)
        g2 = (clin[:, 0:1] * wcs_ref[0:1, :]
              + clin[:, 1:2] * wcs_ref[1:2, :] + bcs_ref[...])        # (B, 2)

        # ---- CompactBilinearPooling(128, 2, 128) -----------------------------------
        # Standard count-sketch / circular-convolution formulation: the 2-dim
        # clinical sketch collapses to two static lane rotations of sx.
        # TODO(synk): CompactBilinearPooling is an external dependency; verify the
        # roll direction against the library's FFT convention before shipping.
        cbp = g2[:, 0:1] * pltpu.roll(sx, shift=h2_0, axis=1) \
            + g2[:, 1:2] * pltpu.roll(sx, shift=h2_1, axis=1)

        # ---- BatchNorm1d(128): module default = train mode -> batch statistics -----
        mean = jnp.mean(cbp, axis=0, keepdims=True)
        var = jnp.mean((cbp - mean) ** 2, axis=0, keepdims=True)
        yb = (cbp - mean) * jax.lax.rsqrt(var + 1e-5) * bnw_ref[...] + bnb_ref[...]

        # ---- ReLU + classifier(128 -> 2), lane-padded to 128 output columns --------
        yb = jnp.maximum(yb, 0.0)
        out_ref[...] = jnp.dot(yb, wcl_ref[...], preferred_element_type=f32) + bcl_ref[...]

    return kernel


# ----------------------------- parameters -----------------------------
def init_params(key):
    ks = jax.random.split(key, 11)

    def nrm(k, shape, scale=0.1):
        return scale * jax.random.normal(k, shape, jnp.float32)

    p = {}
    # backbone Conv2d(3,FEAT,3,pad=1): weight (kh,kw,cin,cout) -> im2col (27,FEAT),
    # zero-padded to PATCH_PAD rows to match the lane-padded lhs.
    w3 = nrm(ks[0], (K3, K3, CIN, FEAT))
    w3f = jnp.reshape(w3, (PATCH, FEAT))
    p["w3f"] = jnp.pad(w3f, ((0, PATCH_PAD - PATCH), (0, 0)))
    p["b3"] = nrm(ks[1], (1, FEAT))

    # SpatialAttention Conv2d(2,1,7,pad=3,bias=False): fold the whole 7x7 conv
    # (both channels, all taps, zero padding) into ONE (2*HW, HW) matrix offline.
    rng7 = np.random.RandomState(1)
    w7 = (0.1 * rng7.standard_normal((2, K7, K7))).astype(np.float32)
    convmat = np.zeros((2 * HW, HW), np.float32)
    for c in range(2):
        for h in range(H):
            for w in range(W):
                p_out = h * W + w
                for dh in range(K7):
                    for dw in range(K7):
                        hi, wi = h + dh - 3, w + dw - 3
                        if 0 <= hi < H and 0 <= wi < W:
                            convmat[c * HW + hi * W + wi, p_out] = w7[c, dh, dw]
    p["convmat"] = jnp.asarray(convmat)

    # SelfAttention: q/k projections are provably dead (softmax over a length-1
    # axis == 1), only gamma survives (PyTorch init: ones(1)).
    p["gamma"] = jnp.ones((1, 1), jnp.float32)

    # Block-diagonal mask fusing the attention gate with adaptive_avg_pool2d.
    pm = np.zeros((B, B * HW), np.float32)
    for b in range(B):
        pm[b, b * HW:(b + 1) * HW] = 1.0 / HW
    p["poolmask"] = jnp.asarray(pm)

    # Bidirectional 1-layer LSTM: W_ih pre-transposed (FEAT, 4*FEAT), biases
    # folded b = b_ih + b_hh (W_hh drops out since h0 = 0).  f-gate columns are
    # removed (they only scale c0 == 0); both directions merged into one matmul.
    def igo(a):  # keep [i, g, o] gate blocks (PyTorch order i,f,g,o), drop f
        return jnp.concatenate([a[..., 0:FEAT],
                                a[..., 2 * FEAT:3 * FEAT],
                                a[..., 3 * FEAT:4 * FEAT]], axis=-1)

    wih_f = nrm(ks[2], (FEAT, 4 * FEAT)); b_f = nrm(ks[3], (1, 4 * FEAT))
    wih_b = nrm(ks[4], (FEAT, 4 * FEAT)); b_b = nrm(ks[5], (1, 4 * FEAT))
    p["wih"] = jnp.concatenate([igo(wih_f), igo(wih_b)], axis=-1)   # (FEAT, 6*FEAT)
    p["bih"] = jnp.concatenate([igo(b_f), igo(b_b)], axis=-1)       # (1, 6*FEAT)

    # Linear(2*FEAT, 128) with the CBP count-sketch S1 folded in offline.
    wl = nrm(ks[6], (2 * FEAT, MCB)); bl = nrm(ks[7], (1, MCB))
    rng = np.random.RandomState(0)
    h1 = rng.randint(0, MCB, size=(MCB,))
    s1 = (rng.randint(0, 2, size=(MCB,)) * 2 - 1).astype(np.float32)
    S1 = np.zeros((MCB, MCB), np.float32)
    S1[np.arange(MCB), h1] = s1
    S1 = jnp.asarray(S1)
    p["wls"] = jnp.dot(wl, S1)
    p["bls"] = jnp.dot(bl, S1)

    # clinical Linear(2,2) with the CBP clinical-side sign sketch s2 folded into
    # the output columns (its hash offsets h2 become static lane rotations).
    h2 = rng.randint(0, MCB, size=(2,))
    s2 = (rng.randint(0, 2, size=(2,)) * 2 - 1).astype(np.float32)
    wc = nrm(ks[8], (2, 2)); bc = nrm(ks[9], (1, 2))
    s2j = jnp.asarray(s2)[None, :]
    p["wcs"] = wc * s2j
    p["bcs"] = bc * s2j
    p["h2"] = (int(h2[0]), int(h2[1]))

    # BatchNorm1d(128) init
    p["bn_w"] = jnp.ones((1, MCB), jnp.float32)
    p["bn_b"] = jnp.zeros((1, MCB), jnp.float32)

    # classifier Linear(128, 2), padded to 128 lane-dense output columns
    # (the wrapper slices [:, :2] outside the kernel).
    wcl = nrm(ks[10], (MCB, 2))
    bcl = jnp.zeros((1, 2), jnp.float32)
    p["wcl"] = jnp.pad(wcl, ((0, 0), (0, MCB - 2)))
    p["bcl"] = jnp.pad(bcl, ((0, 0), (0, MCB - 2)))
    return p


def _full_spec(a):
    nd = a.ndim
    return pl.BlockSpec(a.shape, lambda i, _n=nd: (0,) * _n)


# ------------------------------- forward -------------------------------
def forward(params, x_nchw, clinical):
    # Wrapper-side layout work (one small XLA fusion feeding the kernel):
    # NCHW -> NHWC, spatial pad, im2col to a lane-dense (B*H*W, PATCH_PAD) matrix.
    x = jnp.transpose(x_nchw, (0, 2, 3, 1)).astype(jnp.float32)
    xp = jnp.pad(x, ((0, 0), (1, 1), (1, 1), (0, 0)))
    taps = [xp[:, dh:dh + H, dw:dw + W, :] for dh in range(K3) for dw in range(K3)]
    lhs = jnp.concatenate(taps, axis=-1).reshape(B * H * W, PATCH)
    lhs = jnp.pad(lhs, ((0, 0), (0, PATCH_PAD - PATCH)))            # (B*H*W, 32)

    kernel = make_fused_kernel(params["h2"][0], params["h2"][1])
    inputs = [
        lhs, clinical.astype(jnp.float32),
        params["w3f"], params["b3"], params["convmat"], params["gamma"], params["poolmask"],
        params["wih"], params["bih"], params["wls"], params["bls"],
        params["wcs"], params["bcs"], params["bn_w"], params["bn_b"],
        params["wcl"], params["bcl"],
    ]
    out_pad = pl.pallas_call(
        kernel,
        grid=(1,),
        in_specs=[_full_spec(a) for a in inputs],
        out_specs=pl.BlockSpec((B, MCB), lambda i: (0, 0)),
        out_shape=jax.ShapeDtypeStruct((B, MCB), jnp.float32),
        compiler_params=pltpu.CompilerParams(dimension_semantics=("arbitrary",)),
    )(*inputs)
    return out_pad[:, :2]                                           # slice padded lanes


if __name__ == "__main__":
    key = jax.random.PRNGKey(0)
    kx, kc, kp = jax.random.split(key, 3)
    x = jax.random.normal(kx, (B, CIN, H, W), jnp.float32)          # NCHW like PyTorch
    clinical_features = jax.random.normal(kc, (B, 2), jnp.float32)
    params = init_params(kp)

    fwd = jax.jit(lambda xx, cc: forward(params, xx, cc))
    logits = jax.block_until_ready(fwd(x, clinical_features))
    assert logits.shape == (B, 2) and bool(jnp.all(jnp.isfinite(logits)))
    print("KERNEL_OK")
</pallas_src>

<mosaic_0001>
module attributes {stable_mosaic.version = 11 : i64} {
  func.func @kernel(%arg0: i32, %arg1: memref<512x32xf32, #tpu.memory_space<vmem>>, %arg2: memref<2x2xf32, #tpu.memory_space<vmem>>, %arg3: memref<32x32xf32, #tpu.memory_space<vmem>>, %arg4: memref<1x32xf32, #tpu.memory_space<vmem>>, %arg5: memref<512x256xf32, #tpu.memory_space<vmem>>, %arg6: memref<1x1xf32, #tpu.memory_space<vmem>>, %arg7: memref<2x512xf32, #tpu.memory_space<vmem>>, %arg8: memref<32x192xf32, #tpu.memory_space<vmem>>, %arg9: memref<1x192xf32, #tpu.memory_space<vmem>>, %arg10: memref<64x128xf32, #tpu.memory_space<vmem>>, %arg11: memref<1x128xf32, #tpu.memory_space<vmem>>, %arg12: memref<2x2xf32, #tpu.memory_space<vmem>>, %arg13: memref<1x2xf32, #tpu.memory_space<vmem>>, %arg14: memref<1x128xf32, #tpu.memory_space<vmem>>, %arg15: memref<1x128xf32, #tpu.memory_space<vmem>>, %arg16: memref<128x128xf32, #tpu.memory_space<vmem>>, %arg17: memref<1x128xf32, #tpu.memory_space<vmem>>, %arg18: memref<2x128xf32, #tpu.memory_space<vmem>>) attributes {dimension_semantics = [#tpu.dimension_semantics<arbitrary>], iteration_bounds = array<i64: 1>, scalar_prefetch = 0 : i64, scratch_operands = 0 : i64, tpu.core_type = #tpu.core_type<tc>, window_params = [{pipeline_mode = #tpu.pipeline_mode<synchronous>, transform_indices = @transform_0, window_bounds = array<i64: 512, 32>}, {pipeline_mode = #tpu.pipeline_mode<synchronous>, transform_indices = @transform_1, window_bounds = array<i64: 2, 2>}, {pipeline_mode = #tpu.pipeline_mode<synchronous>, transform_indices = @transform_2, window_bounds = array<i64: 32, 32>}, {pipeline_mode = #tpu.pipeline_mode<synchronous>, transform_indices = @transform_3, window_bounds = array<i64: 1, 32>}, {pipeline_mode = #tpu.pipeline_mode<synchronous>, transform_indices = @transform_4, window_bounds = array<i64: 512, 256>}, {pipeline_mode = #tpu.pipeline_mode<synchronous>, transform_indices = @transform_5, window_bounds = array<i64: 1, 1>}, {pipeline_mode = #tpu.pipeline_mode<synchronous>, transform_indices = @transform_6, window_bounds = array<i64: 2, 512>}, {pipeline_mode = #tpu.pipeline_mode<synchronous>, transform_indices = @transform_7, window_bounds = array<i64: 32, 192>}, {pipeline_mode = #tpu.pipeline_mode<synchronous>, transform_indices = @transform_8, window_bounds = array<i64: 1, 192>}, {pipeline_mode = #tpu.pipeline_mode<synchronous>, transform_indices = @transform_9, window_bounds = array<i64: 64, 128>}, {pipeline_mode = #tpu.pipeline_mode<synchronous>, transform_indices = @transform_10, window_bounds = array<i64: 1, 128>}, {pipeline_mode = #tpu.pipeline_mode<synchronous>, transform_indices = @transform_11, window_bounds = array<i64: 2, 2>}, {pipeline_mode = #tpu.pipeline_mode<synchronous>, transform_indices = @transform_12, window_bounds = array<i64: 1, 2>}, {pipeline_mode = #tpu.pipeline_mode<synchronous>, transform_indices = @transform_13, window_bounds = array<i64: 1, 128>}, {pipeline_mode = #tpu.pipeline_mode<synchronous>, transform_indices = @transform_14, window_bounds = array<i64: 1, 128>}, {pipeline_mode = #tpu.pipeline_mode<synchronous>, transform_indices = @transform_15, window_bounds = array<i64: 128, 128>}, {pipeline_mode = #tpu.pipeline_mode<synchronous>, transform_indices = @transform_16, window_bounds = array<i64: 1, 128>}, {pipeline_mode = #tpu.pipeline_mode<synchronous>, transform_indices = @transform_17, window_bounds = array<i64: 2, 128>}]} {
    %c0 = arith.constant 0 : index
    %c0_0 = arith.constant 0 : index
    %0 = vector.load %arg1[%c0, %c0_0] : memref<512x32xf32, #tpu.memory_space<vmem>>, vector<512x32xf32>
    %c0_1 = arith.constant 0 : index
    %c0_2 = arith.constant 0 : index
    %1 = vector.load %arg3[%c0_1, %c0_2] : memref<32x32xf32, #tpu.memory_space<vmem>>, vector<32x32xf32>
    %cst = arith.constant dense<0.000000e+00> : vector<512x32xf32>
    %2 = tpu.matmul %0, %1, %cst {dimension_numbers = #tpu.dot_dimension_numbers<[1], [0], [0], [1], [0, 0, 1, 1], [], []>} : vector<512x32xf32>, vector<32x32xf32>, vector<512x32xf32> -> vector<512x32xf32>
    %c0_3 = arith.constant 0 : index
    %c0_4 = arith.constant 0 : index
    %3 = vector.load %arg4[%c0_3, %c0_4] : memref<1x32xf32, #tpu.memory_space<vmem>>, vector<1x32xf32>
    %4 = vector.broadcast %3 : vector<1x32xf32> to vector<512x32xf32>
    %5 = arith.addf %2, %4 : vector<512x32xf32>
    %cst_5 = arith.constant 0.000000e+00 : f32
    %6 = vector.broadcast %cst_5 : f32 to vector<512x32xf32>
    %7 = arith.maximumf %5, %6 : vector<512x32xf32>
    %cst_6 = arith.constant dense<0.000000e+00> : vector<512xf32>
    %8 = vector.multi_reduction <add>, %7, %cst_6 [1] : vector<512x32xf32> to vector<512xf32>
    %9 = vector.shape_cast %8 : vector<512xf32> to vector<512x1xf32>
    %cst_7 = arith.constant 3.200000e+01 : f32
    %10 = vector.broadcast %cst_7 : f32 to vector<512x1xf32>
    %11 = arith.divf %9, %10 : vector<512x1xf32>
    %12 = vector.shape_cast %11 : vector<512x1xf32> to vector<2x256xf32>
    %cst_8 = arith.constant dense<0xFF800000> : vector<512xf32>
    %13 = vector.multi_reduction <maximumf>, %7, %cst_8 [1] : vector<512x32xf32> to vector<512xf32>
    %14 = vector.shape_cast %13 : vector<512xf32> to vector<512x1xf32>
    %15 = vector.shape_cast %14 : vector<512x1xf32> to vector<2x256xf32>
    %16 = tpu.concatenate %12, %15 in 1 : vector<2x256xf32>, vector<2x256xf32> -> vector<2x512xf32>
    %c0_9 = arith.constant 0 : index
    %c0_10 = arith.constant 0 : index
    %17 = vector.load %arg5[%c0_9, %c0_10] : memref<512x256xf32, #tpu.memory_space<vmem>>, vector<512x256xf32>
    %cst_11 = arith.constant dense<0.000000e+00> : vector<2x256xf32>
    %18 = tpu.matmul %16, %17, %cst_11 {dimension_numbers = #tpu.dot_dimension_numbers<[1], [0], [0], [1], [0, 0, 1, 1], [], []>} : vector<2x512xf32>, vector<512x256xf32>, vector<2x256xf32> -> vector<2x256xf32>
    %19 = arith.negf %18 : vector<2x256xf32>
    %20 = math.exp %19 : vector<2x256xf32>
    %cst_12 = arith.constant 1.000000e+00 : f32
    %21 = vector.broadcast %cst_12 : f32 to vector<2x256xf32>
    %22 = arith.addf %21, %20 : vector<2x256xf32>
    %23 = arith.divf %21, %22 : vector<2x256xf32>
    %24 = tpu.concatenate %23, %23 in 1 : vector<2x256xf32>, vector<2x256xf32> -> vector<2x512xf32>
    %c0_13 = arith.constant 0 : index
    %c0_14 = arith.constant 0 : index
    %25 = vector.load %arg7[%c0_13, %c0_14] : memref<2x512xf32, #tpu.memory_space<vmem>>, vector<2x512xf32>
    %26 = arith.mulf %24, %25 : vector<2x512xf32>
    %cst_15 = arith.constant dense<0.000000e+00> : vector<2x32xf32>
    %27 = tpu.matmul %26, %7, %cst_15 {dimension_numbers = #tpu.dot_dimension_numbers<[1], [0], [0], [1], [0, 0, 1, 1], [], []>} : vector<2x512xf32>, vector<512x32xf32>, vector<2x32xf32> -> vector<2x32xf32>
    %c0_16 = arith.constant 0 : index
    %c0_17 = arith.constant 0 : index
    %28 = vector.load %arg6[%c0_16, %c0_17] : memref<1x1xf32, #tpu.memory_space<vmem>>, vector<1x1xf32>
    %29 = vector.broadcast %28 : vector<1x1xf32> to vector<2x32xf32>
    %30 = arith.mulf %29, %27 : vector<2x32xf32>
    %31 = arith.addf %30, %27 : vector<2x32xf32>
    %c0_18 = arith.constant 0 : index
    %c0_19 = arith.constant 0 : index
    %32 = vector.load %arg8[%c0_18, %c0_19] : memref<32x192xf32, #tpu.memory_space<vmem>>, vector<32x192xf32>
    %cst_20 = arith.constant dense<0.000000e+00> : vector<2x192xf32>
    %33 = tpu.matmul %31, %32, %cst_20 {dimension_numbers = #tpu.dot_dimension_numbers<[1], [0], [0], [1], [0, 0, 1, 1], [], []>} : vector<2x32xf32>, vector<32x192xf32>, vector<2x192xf32> -> vector<2x192xf32>
    %c0_21 = arith.constant 0 : index
    %c0_22 = arith.constant 0 : index
    %34 = vector.load %arg9[%c0_21, %c0_22] : memref<1x192xf32, #tpu.memory_space<vmem>>, vector<1x192xf32>
    %35 = vector.broadcast %34 : vector<1x192xf32> to vector<2x192xf32>
    %36 = arith.addf %33, %35 : vector<2x192xf32>
    %37 = vector.extract_strided_slice %36 {offsets = [0, 0], sizes = [2, 96], strides = [1, 1]} : vector<2x192xf32> to vector<2x96xf32>
    %38 = vector.extract_strided_slice %37 {offsets = [0, 0], sizes = [2, 32], strides = [1, 1]} : vector<2x96xf32> to vector<2x32xf32>
    %39 = arith.negf %38 : vector<2x32xf32>
    %40 = math.exp %39 : vector<2x32xf32>
    %cst_23 = arith.constant 1.000000e+00 : f32
    %41 = vector.broadcast %cst_23 : f32 to vector<2x32xf32>
    %42 = arith.addf %41, %40 : vector<2x32xf32>
    %43 = arith.divf %41, %42 : vector<2x32xf32>
    %44 = vector.extract_strided_slice %37 {offsets = [0, 32], sizes = [2, 32], strides = [1, 1]} : vector<2x96xf32> to vector<2x32xf32>
    %45 = math.tanh %44 : vector<2x32xf32>
    %46 = vector.extract_strided_slice %37 {offsets = [0, 64], sizes = [2, 32], strides = [1, 1]} : vector<2x96xf32> to vector<2x32xf32>
    %47 = arith.negf %46 : vector<2x32xf32>
    %48 = math.exp %47 : vector<2x32xf32>
    %cst_24 = arith.constant 1.000000e+00 : f32
    %49 = vector.broadcast %cst_24 : f32 to vector<2x32xf32>
    %50 = arith.addf %49, %48 : vector<2x32xf32>
    %51 = arith.divf %49, %50 : vector<2x32xf32>
    %52 = arith.mulf %43, %45 : vector<2x32xf32>
    %53 = math.tanh %52 : vector<2x32xf32>
    %54 = arith.mulf %51, %53 : vector<2x32xf32>
    %55 = vector.extract_strided_slice %36 {offsets = [0, 96], sizes = [2, 96], strides = [1, 1]} : vector<2x192xf32> to vector<2x96xf32>
    %56 = vector.extract_strided_slice %55 {offsets = [0, 0], sizes = [2, 32], strides = [1, 1]} : vector<2x96xf32> to vector<2x32xf32>
    %57 = arith.negf %56 : vector<2x32xf32>
    %58 = math.exp %57 : vector<2x32xf32>
    %cst_25 = arith.constant 1.000000e+00 : f32
    %59 = vector.broadcast %cst_25 : f32 to vector<2x32xf32>
    %60 = arith.addf %59, %58 : vector<2x32xf32>
    %61 = arith.divf %59, %60 : vector<2x32xf32>
    %62 = vector.extract_strided_slice %55 {offsets = [0, 32], sizes = [2, 32], strides = [1, 1]} : vector<2x96xf32> to vector<2x32xf32>
    %63 = math.tanh %62 : vector<2x32xf32>
    %64 = vector.extract_strided_slice %55 {offsets = [0, 64], sizes = [2, 32], strides = [1, 1]} : vector<2x96xf32> to vector<2x32xf32>
    %65 = arith.negf %64 : vector<2x32xf32>
    %66 = math.exp %65 : vector<2x32xf32>
    %cst_26 = arith.constant 1.000000e+00 : f32
    %67 = vector.broadcast %cst_26 : f32 to vector<2x32xf32>
    %68 = arith.addf %67, %66 : vector<2x32xf32>
    %69 = arith.divf %67, %68 : vector<2x32xf32>
    %70 = arith.mulf %61, %63 : vector<2x32xf32>
    %71 = math.tanh %70 : vector<2x32xf32>
    %72 = arith.mulf %69, %71 : vector<2x32xf32>
    %73 = tpu.concatenate %54, %72 in 1 : vector<2x32xf32>, vector<2x32xf32> -> vector<2x64xf32>
    %c0_27 = arith.constant 0 : index
    %c0_28 = arith.constant 0 : index
    %74 = vector.load %arg10[%c0_27, %c0_28] : memref<64x128xf32, #tpu.memory_space<vmem>>, vector<64x128xf32>
    %cst_29 = arith.constant dense<0.000000e+00> : vector<2x128xf32>
    %75 = tpu.matmul %73, %74, %cst_29 {dimension_numbers = #tpu.dot_dimension_numbers<[1], [0], [0], [1], [0, 0, 1, 1], [], []>} : vector<2x64xf32>, vector<64x128xf32>, vector<2x128xf32> -> vector<2x128xf32>
    %c0_30 = arith.constant 0 : index
    %c0_31 = arith.constant 0 : index
    %76 = vector.load %arg11[%c0_30, %c0_31] : memref<1x128xf32, #tpu.memory_space<vmem>>, vector<1x128xf32>
    %77 = vector.broadcast %76 : vector<1x128xf32> to vector<2x128xf32>
    %78 = arith.addf %75, %77 : vector<2x128xf32>
    %c0_32 = arith.constant 0 : index
    %c0_33 = arith.constant 0 : index
    %79 = vector.load %arg2[%c0_32, %c0_33] : memref<2x2xf32, #tpu.memory_space<vmem>>, vector<2x2xf32>
    %80 = vector.extract_strided_slice %79 {offsets = [0, 0], sizes = [2, 1], strides = [1, 1]} : vector<2x2xf32> to vector<2x1xf32>
    %c0_34 = arith.constant 0 : index
    %c0_35 = arith.constant 0 : index
    %81 = vector.load %arg12[%c0_34, %c0_35] : memref<2x2xf32, #tpu.memory_space<vmem>>, vector<1x2xf32>
    %82 = vector.broadcast %80 : vector<2x1xf32> to vector<2x2xf32>
    %83 = vector.broadcast %81 : vector<1x2xf32> to vector<2x2xf32>
    %84 = arith.mulf %82, %83 : vector<2x2xf32>
    %85 = vector.extract_strided_slice %79 {offsets = [0, 1], sizes = [2, 1], strides = [1, 1]} : vector<2x2xf32> to vector<2x1xf32>
    %c1 = arith.constant 1 : index
    %c0_36 = arith.constant 0 : index
    %86 = vector.load %arg12[%c1, %c0_36] : memref<2x2xf32, #tpu.memory_space<vmem>>, vector<1x2xf32>
    %87 = vector.broadcast %85 : vector<2x1xf32> to vector<2x2xf32>
    %88 = vector.broadcast %86 : vector<1x2xf32> to vector<2x2xf32>
    %89 = arith.mulf %87, %88 : vector<2x2xf32>
    %90 = arith.addf %84, %89 : vector<2x2xf32>
    %c0_37 = arith.constant 0 : index
    %c0_38 = arith.constant 0 : index
    %91 = vector.load %arg13[%c0_37, %c0_38] : memref<1x2xf32, #tpu.memory_space<vmem>>, vector<1x2xf32>
    %92 = vector.broadcast %91 : vector<1x2xf32> to vector<2x2xf32>
    %93 = arith.addf %90, %92 : vector<2x2xf32>
    %94 = vector.extract_strided_slice %93 {offsets = [0, 0], sizes = [2, 1], strides = [1, 1]} : vector<2x2xf32> to vector<2x1xf32>
    %c13_i32 = arith.constant 13 : i32
    %95 = tpu.dynamic_rotate %78 by %c13_i32 dim 1 : vector<2x128xf32>, i32 -> vector<2x128xf32>
    %96 = vector.broadcast %94 : vector<2x1xf32> to vector<2x128xf32>
    %97 = arith.mulf %96, %95 : vector<2x128xf32>
    %98 = vector.extract_strided_slice %93 {offsets = [0, 1], sizes = [2, 1], strides = [1, 1]} : vector<2x2xf32> to vector<2x1xf32>
    %c71_i32 = arith.constant 71 : i32
    %99 = tpu.dynamic_rotate %78 by %c71_i32 dim 1 : vector<2x128xf32>, i32 -> vector<2x128xf32>
    %100 = vector.broadcast %98 : vector<2x1xf32> to vector<2x128xf32>
    %101 = arith.mulf %100, %99 : vector<2x128xf32>
    %102 = arith.addf %97, %101 : vector<2x128xf32>
    %cst_39 = arith.constant dense<0.000000e+00> : vector<128xf32>
    %103 = vector.multi_reduction <add>, %102, %cst_39 [0] : vector<2x128xf32> to vector<128xf32>
    %104 = vector.shape_cast %103 : vector<128xf32> to vector<1x128xf32>
    %cst_40 = arith.constant 2.000000e+00 : f32
    %105 = vector.broadcast %cst_40 : f32 to vector<1x128xf32>
    %106 = arith.divf %104, %105 : vector<1x128xf32>
    %107 = vector.broadcast %106 : vector<1x128xf32> to vector<2x128xf32>
    %108 = arith.subf %102, %107 : vector<2x128xf32>
    %109 = arith.mulf %108, %108 : vector<2x128xf32>
    %cst_41 = arith.constant dense<0.000000e+00> : vector<128xf32>
    %110 = vector.multi_reduction <add>, %109, %cst_41 [0] : vector<2x128xf32> to vector<128xf32>
    %111 = vector.shape_cast %110 : vector<128xf32> to vector<1x128xf32>
    %cst_42 = arith.constant 2.000000e+00 : f32
    %112 = vector.broadcast %cst_42 : f32 to vector<1x128xf32>
    %113 = arith.divf %111, %112 : vector<1x128xf32>
    %114 = vector.broadcast %106 : vector<1x128xf32> to vector<2x128xf32>
    %115 = arith.subf %102, %114 : vector<2x128xf32>
    %cst_43 = arith.constant 9.99999974E-6 : f32
    %116 = vector.broadcast %cst_43 : f32 to vector<1x128xf32>
    %117 = arith.addf %113, %116 : vector<1x128xf32>
    %118 = math.rsqrt %117 : vector<1x128xf32>
    %119 = vector.broadcast %118 : vector<1x128xf32> to vector<2x128xf32>
    %120 = arith.mulf %115, %119 : vector<2x128xf32>
    %c0_44 = arith.constant 0 : index
    %c0_45 = arith.constant 0 : index
    %121 = vector.load %arg14[%c0_44, %c0_45] : memref<1x128xf32, #tpu.memory_space<vmem>>, vector<1x128xf32>
    %122 = vector.broadcast %121 : vector<1x128xf32> to vector<2x128xf32>
    %123 = arith.mulf %120, %122 : vector<2x128xf32>
    %c0_46 = arith.constant 0 : index
    %c0_47 = arith.constant 0 : index
    %124 = vector.load %arg15[%c0_46, %c0_47] : memref<1x128xf32, #tpu.memory_space<vmem>>, vector<1x128xf32>
    %125 = vector.broadcast %124 : vector<1x128xf32> to vector<2x128xf32>
    %126 = arith.addf %123, %125 : vector<2x128xf32>
    %cst_48 = arith.constant 0.000000e+00 : f32
    %127 = vector.broadcast %cst_48 : f32 to vector<2x128xf32>
    %128 = arith.maximumf %126, %127 : vector<2x128xf32>
    %c0_49 = arith.constant 0 : index
    %c0_50 = arith.constant 0 : index
    %129 = vector.load %arg16[%c0_49, %c0_50] : memref<128x128xf32, #tpu.memory_space<vmem>>, vector<128x128xf32>
    %cst_51 = arith.constant dense<0.000000e+00> : vector<2x128xf32>
    %130 = tpu.matmul %128, %129, %cst_51 {dimension_numbers = #tpu.dot_dimension_numbers<[1], [0], [0], [1], [0, 0, 1, 1], [], []>} : vector<2x128xf32>, vector<128x128xf32>, vector<2x128xf32> -> vector<2x128xf32>
    %c0_52 = arith.constant 0 : index
    %c0_53 = arith.constant 0 : index
    %131 = vector.load %arg17[%c0_52, %c0_53] : memref<1x128xf32, #tpu.memory_space<vmem>>, vector<1x128xf32>
    %132 = vector.broadcast %131 : vector<1x128xf32> to vector<2x128xf32>
    %133 = arith.addf %130, %132 : vector<2x128xf32>
    %c0_54 = arith.constant 0 : index
    %c0_55 = arith.constant 0 : index
    %134 = vector.load %arg18[%c0_54, %c0_55] : memref<2x128xf32, #tpu.memory_space<vmem>>, vector<2x128xf32>
    tpu.vector_store %arg18[%c0_54, %c0_55], %133 {strides = array<i32>} : memref<2x128xf32, #tpu.memory_space<vmem>>, vector<2x128xf32>,
    return
  }
  func.func @transform_0(%arg0: i32) -> (i32, i32) {
    %c0_i32 = arith.constant 0 : i32
    %c0_i32_0 = arith.constant 0 : i32
    %c0_i32_1 = arith.constant 0 : i32
    return %c0_i32, %c0_i32_0 : i32, i32
  }
  func.func @transform_1(%arg0: i32) -> (i32, i32) {
    %c0_i32 = arith.constant 0 : i32
    %c0_i32_0 = arith.constant 0 : i32
    %c0_i32_1 = arith.constant 0 : i32
    return %c0_i32, %c0_i32_0 : i32, i32
  }
  func.func @transform_2(%arg0: i32) -> (i32, i32) {
    %c0_i32 = arith.constant 0 : i32
    %c0_i32_0 = arith.constant 0 : i32
    %c0_i32_1 = arith.constant 0 : i32
    return %c0_i32, %c0_i32_0 : i32, i32
  }
  func.func @transform_3(%arg0: i32) -> (i32, i32) {
    %c0_i32 = arith.constant 0 : i32
    %c0_i32_0 = arith.constant 0 : i32
    %c0_i32_1 = arith.constant 0 : i32
    return %c0_i32, %c0_i32_0 : i32, i32
  }
  func.func @transform_4(%arg0: i32) -> (i32, i32) {
    %c0_i32 = arith.constant 0 : i32
    %c0_i32_0 = arith.constant 0 : i32
    %c0_i32_1 = arith.constant 0 : i32
    return %c0_i32, %c0_i32_0 : i32, i32
  }
  func.func @transform_5(%arg0: i32) -> (i32, i32) {
    %c0_i32 = arith.constant 0 : i32
    %c0_i32_0 = arith.constant 0 : i32
    %c0_i32_1 = arith.constant 0 : i32
    return %c0_i32, %c0_i32_0 : i32, i32
  }
  func.func @transform_6(%arg0: i32) -> (i32, i32) {
    %c0_i32 = arith.constant 0 : i32
    %c0_i32_0 = arith.constant 0 : i32
    %c0_i32_1 = arith.constant 0 : i32
    return %c0_i32, %c0_i32_0 : i32, i32
  }
  func.func @transform_7(%arg0: i32) -> (i32, i32) {
    %c0_i32 = arith.constant 0 : i32
    %c0_i32_0 = arith.constant 0 : i32
    %c0_i32_1 = arith.constant 0 : i32
    return %c0_i32, %c0_i32_0 : i32, i32
  }
  func.func @transform_8(%arg0: i32) -> (i32, i32) {
    %c0_i32 = arith.constant 0 : i32
    %c0_i32_0 = arith.constant 0 : i32
    %c0_i32_1 = arith.constant 0 : i32
    return %c0_i32, %c0_i32_0 : i32, i32
  }
  func.func @transform_9(%arg0: i32) -> (i32, i32) {
    %c0_i32 = arith.constant 0 : i32
    %c0_i32_0 = arith.constant 0 : i32
    %c0_i32_1 = arith.constant 0 : i32
    return %c0_i32, %c0_i32_0 : i32, i32
  }
  func.func @transform_10(%arg0: i32) -> (i32, i32) {
    %c0_i32 = arith.constant 0 : i32
    %c0_i32_0 = arith.constant 0 : i32
    %c0_i32_1 = arith.constant 0 : i32
    return %c0_i32, %c0_i32_0 : i32, i32
  }
  func.func @transform_11(%arg0: i32) -> (i32, i32) {
    %c0_i32 = arith.constant 0 : i32
    %c0_i32_0 = arith.constant 0 : i32
    %c0_i32_1 = arith.constant 0 : i32
    return %c0_i32, %c0_i32_0 : i32, i32
  }
  func.func @transform_12(%arg0: i32) -> (i32, i32) {
    %c0_i32 = arith.constant 0 : i32
    %c0_i32_0 = arith.constant 0 : i32
    %c0_i32_1 = arith.constant 0 : i32
    return %c0_i32, %c0_i32_0 : i32, i32
  }
  func.func @transform_13(%arg0: i32) -> (i32, i32) {
    %c0_i32 = arith.constant 0 : i32
    %c0_i32_0 = arith.constant 0 : i32
    %c0_i32_1 = arith.constant 0 : i32
    return %c0_i32, %c0_i32_0 : i32, i32
  }
  func.func @transform_14(%arg0: i32) -> (i32, i32) {
    %c0_i32 = arith.constant 0 : i32
    %c0_i32_0 = arith.constant 0 : i32
    %c0_i32_1 = arith.constant 0 : i32
    return %c0_i32, %c0_i32_0 : i32, i32
  }
  func.func @transform_15(%arg0: i32) -> (i32, i32) {
    %c0_i32 = arith.constant 0 : i32
    %c0_i32_0 = arith.constant 0 : i32
    %c0_i32_1 = arith.constant 0 : i32
    return %c0_i32, %c0_i32_0 : i32, i32
  }
  func.func @transform_16(%arg0: i32) -> (i32, i32) {
    %c0_i32 = arith.constant 0 : i32
    %c0_i32_0 = arith.constant 0 : i32
    %c0_i32_1 = arith.constant 0 : i32
    return %c0_i32, %c0_i32_0 : i32, i32
  }
  func.func @transform_17(%arg0: i32) -> (i32, i32) {
    %c0_i32 = arith.constant 0 : i32
    %c0_i32_0 = arith.constant 0 : i32
    %c0_i32_1 = arith.constant 0 : i32
    return %c0_i32, %c0_i32_0 : i32, i32
  }
}

</mosaic_0001>

<llo_original>
// kernel: _lambda_.1
$region0: #{_lambda_.1}
  #allocation0 [shape = 'u32[]', space=smem, size = 0x4, offset = 0x4, fixed_abs, tag = 'smem constant byte address 0x4 - core index']
  #allocation1 [shape = 'u32[144,128]{1,0:T(1,128)}', space=vmem, size = 0x12000, scoped, tag = 'internal scratch']
  #allocation2 [shape = 'f32[1,1]{1,0:T(1,128)S(1)}', space=vmem, size = 0x200, scoped, tag = 'scoped memory for _lambda_.1']
  %s0 = inlined_call_operand.vmem [shape: f32[512,32], index: 0, kind: input, shape index: {}]
  %s1 = inlined_call_operand.vmem [shape: f32[2,2], index: 1, kind: input, shape index: {}]
  %s2 = inlined_call_operand.vmem [shape: f32[32,32], index: 2, kind: input, shape index: {}]
  %s3 = inlined_call_operand.vmem [shape: f32[1,32], index: 3, kind: input, shape index: {}]
  %s4 = inlined_call_operand.vmem [shape: f32[512,256], index: 4, kind: input, shape index: {}]
  %s5 = inlined_call_operand.<no memory space> [shape: f32[1,1], index: 5, kind: input, shape index: {}]
  %s6 = inlined_call_operand.vmem [shape: f32[2,512], index: 6, kind: input, shape index: {}]
  %s7 = inlined_call_operand.vmem [shape: f32[32,192], index: 7, kind: input, shape index: {}]
  %s8 = inlined_call_operand.vmem [shape: f32[1,192], index: 8, kind: input, shape index: {}]
  %s9 = inlined_call_operand.vmem [shape: f32[64,128], index: 9, kind: input, shape index: {}]
  %s10 = inlined_call_operand.vmem [shape: f32[1,128], index: 10, kind: input, shape index: {}]
  %s11 = inlined_call_operand.vmem [shape: f32[2,2], index: 11, kind: input, shape index: {}]
  %s12 = inlined_call_operand.vmem [shape: f32[1,2], index: 12, kind: input, shape index: {}]
  %s13 = inlined_call_operand.vmem [shape: f32[1,128], index: 13, kind: input, shape index: {}]
  %s14 = inlined_call_operand.vmem [shape: f32[1,128], index: 14, kind: input, shape index: {}, may-alias: {14,16}]
  %s15 = inlined_call_operand.vmem [shape: f32[128,128], index: 15, kind: input, shape index: {}]
  %s16 = inlined_call_operand.vmem [shape: f32[1,128], index: 16, kind: input, shape index: {}, may-alias: {14,16}]
  %s17 = inlined_call_operand.hbm [shape: f32[2,128], index: 17, kind: output, shape index: {}]
  %s18 = sld [smem:[#allocation0]]
  $region78: #{_lambda_.1} parent=0
    _
  %s20 = ssub.s32 1, %s18
  %s21 = scalar_select 0, %s20, %s18
  %v22 = vstv %s5
  %23 = vst [vmem:[#allocation2] sm:$0x1] %v22
  $region1: #{_lambda_.1} parent=0
    #allocation3 [shape = 'u8[1024]{0}', space=vmem, size = 0x400, scoped, tag = 'output window, operand 0, single buffered']
    #allocation4 [shape = 's32[1]{0}', space=sflag, size = 0x4, scoped, tag = 'scoped memory for _lambda_.1']
    %24 = vsyncpa [#allocation4], 0
    // Predicated region
    $region2: #{_lambda_.1} parent=1 // pred_check
      _
    $region3: #{_lambda_.1} parent=1 // pred_check_branch
      %26 = sbr.rel (0) target = $region5
    $region4: #{_lambda_.1} parent=1 // pred_region
      _
    $region5: #{_lambda_.1} parent=1 // pred_fallthru
      _
    // Predicated region
    $region6: #{_lambda_.1} parent=1 // pred_check
      _
    $region7: #{_lambda_.1} parent=1 // pred_check_branch
      %28 = sbr.rel (0) target = $region9
    $region8: #{_lambda_.1} parent=1 // pred_region
      _
    $region9: #{_lambda_.1} parent=1 // pred_fallthru
      _
    // Predicated region
    $region10: #{_lambda_.1} parent=1 // pred_check
      _
    $region11: #{_lambda_.1} parent=1 // pred_check_branch
      %30 = sbr.rel (0) target = $region13
    $region12: #{_lambda_.1} parent=1 // pred_region
      _
    $region13: #{_lambda_.1} parent=1 // pred_fallthru
      _
    // Predicated region
    $region14: #{_lambda_.1} parent=1 // pred_check
      _
    $region15: #{_lambda_.1} parent=1 // pred_check_branch
      %32 = sbr.rel (0) target = $region17
    $region16: #{_lambda_.1} parent=1 // pred_region
      _
    $region17: #{_lambda_.1} parent=1 // pred_fallthru
      _
    // Predicated region
    $region18: #{_lambda_.1} parent=1 // pred_check
      _
    $region19: #{_lambda_.1} parent=1 // pred_check_branch
      %34 = sbr.rel (0) target = $region21
    $region20: #{_lambda_.1} parent=1 // pred_region
      _
    $region21: #{_lambda_.1} parent=1 // pred_fallthru
      _
    // Predicated region
    $region22: #{_lambda_.1} parent=1 // pred_check
      _
    $region23: #{_lambda_.1} parent=1 // pred_check_branch
      %36 = sbr.rel (0) target = $region25
    $region24: #{_lambda_.1} parent=1 // pred_region
      _
    $region25: #{_lambda_.1} parent=1 // pred_fallthru
      _
    // Predicated region
    $region26: #{_lambda_.1} parent=1 // pred_check
      _
    $region27: #{_lambda_.1} parent=1 // pred_check_branch
      %38 = sbr.rel (0) target = $region29
    $region28: #{_lambda_.1} parent=1 // pred_region
      _
    $region29: #{_lambda_.1} parent=1 // pred_fallthru
      _
    // Predicated region
    $region30: #{_lambda_.1} parent=1 // pred_check
      _
    $region31: #{_lambda_.1} parent=1 // pred_check_branch
      %40 = sbr.rel (0) target = $region33
    $region32: #{_lambda_.1} parent=1 // pred_region
      _
    $region33: #{_lambda_.1} parent=1 // pred_fallthru
      _
    // Predicated region
    $region34: #{_lambda_.1} parent=1 // pred_check
      _
    $region35: #{_lambda_.1} parent=1 // pred_check_branch
      %42 = sbr.rel (0) target = $region37
    $region36: #{_lambda_.1} parent=1 // pred_region
      _
    $region37: #{_lambda_.1} parent=1 // pred_fallthru
      _
    // Predicated region
    $region38: #{_lambda_.1} parent=1 // pred_check
      _
    $region39: #{_lambda_.1} parent=1 // pred_check_branch
      %44 = sbr.rel (0) target = $region41
    $region40: #{_lambda_.1} parent=1 // pred_region
      _
    $region41: #{_lambda_.1} parent=1 // pred_fallthru
      _
    // Predicated region
    $region42: #{_lambda_.1} parent=1 // pred_check
      _
    $region43: #{_lambda_.1} parent=1 // pred_check_branch
      %46 = sbr.rel (0) target = $region45
    $region44: #{_lambda_.1} parent=1 // pred_region
      _
    $region45: #{_lambda_.1} parent=1 // pred_fallthru
      _
    // Predicated region
    $region46: #{_lambda_.1} parent=1 // pred_check
      _
    $region47: #{_lambda_.1} parent=1 // pred_check_branch
      %48 = sbr.rel (0) target = $region49
    $region48: #{_lambda_.1} parent=1 // pred_region
      _
    $region49: #{_lambda_.1} parent=1 // pred_fallthru
      _
    // Predicated region
    $region50: #{_lambda_.1} parent=1 // pred_check
      _
    $region51: #{_lambda_.1} parent=1 // pred_check_branch
      %50 = sbr.rel (0) target = $region53
    $region52: #{_lambda_.1} parent=1 // pred_region
      _
    $region53: #{_lambda_.1} parent=1 // pred_fallthru
      _
    // Predicated region
    $region54: #{_lambda_.1} parent=1 // pred_check
      _
    $region55: #{_lambda_.1} parent=1 // pred_check_branch
      %52 = sbr.rel (0) target = $region57
    $region56: #{_lambda_.1} parent=1 // pred_region
      _
    $region57: #{_lambda_.1} parent=1 // pred_fallthru
      _
    // Predicated region
    $region58: #{_lambda_.1} parent=1 // pred_check
      _
    $region59: #{_lambda_.1} parent=1 // pred_check_branch
      %54 = sbr.rel (0) target = $region61
    $region60: #{_lambda_.1} parent=1 // pred_region
      _
    $region61: #{_lambda_.1} parent=1 // pred_fallthru
      _
    // Predicated region
    $region62: #{_lambda_.1} parent=1 // pred_check
      _
    $region63: #{_lambda_.1} parent=1 // pred_check_branch
      %56 = sbr.rel (0) target = $region65
    $region64: #{_lambda_.1} parent=1 // pred_region
      _
    $region65: #{_lambda_.1} parent=1 // pred_fallthru
      _
    // Predicated region
    $region66: #{_lambda_.1} parent=1 // pred_check
      _
    $region67: #{_lambda_.1} parent=1 // pred_check_branch
      %58 = sbr.rel (0) target = $region69
    $region68: #{_lambda_.1} parent=1 // pred_region
      _
    $region69: #{_lambda_.1} parent=1 // pred_fallthru
      _
    %v59 = vld [vmem:[%s0] sm:$0xff]
    %v60 = vld [vmem:[%s0 + $0x8] sm:$0xff]
    %v61 = vld [vmem:[%s0 + $0x10] sm:$0xff]
    %v62 = vld [vmem:[%s0 + $0x18] sm:$0xff]
    %v63 = vld [vmem:[%s0 + $0x20] sm:$0xff]
    %v64 = vld [vmem:[%s0 + $0x28] sm:$0xff]
    %v65 = vld [vmem:[%s0 + $0x30] sm:$0xff]
    %v66 = vld [vmem:[%s0 + $0x38] sm:$0xff]
    %v67 = vld [vmem:[%s0 + $0x40] sm:$0xff]
    %v68 = vld [vmem:[%s0 + $0x48] sm:$0xff]
    %v69 = vld [vmem:[%s0 + $0x50] sm:$0xff]
    %v70 = vld [vmem:[%s0 + $0x58] sm:$0xff]
    %v71 = vld [vmem:[%s0 + $0x60] sm:$0xff]
    %v72 = vld [vmem:[%s0 + $0x68] sm:$0xff]
    %v73 = vld [vmem:[%s0 + $0x70] sm:$0xff]
    %v74 = vld [vmem:[%s0 + $0x78] sm:$0xff]
    %v75 = vld [vmem:[%s0 + $0x80] sm:$0xff]
    %v76 = vld [vmem:[%s0 + $0x88] sm:$0xff]
    %v77 = vld [vmem:[%s0 + $0x90] sm:$0xff]
    %v78 = vld [vmem:[%s0 + $0x98] sm:$0xff]
    %v79 = vld [vmem:[%s0 + $0xa0] sm:$0xff]
    %v80 = vld [vmem:[%s0 + $0xa8] sm:$0xff]
    %v81 = vld [vmem:[%s0 + $0xb0] sm:$0xff]
    %v82 = vld [vmem:[%s0 + $0xb8] sm:$0xff]
    %v83 = vld [vmem:[%s0 + $0xc0] sm:$0xff]
    %v84 = vld [vmem:[%s0 + $0xc8] sm:$0xff]
    %v85 = vld [vmem:[%s0 + $0xd0] sm:$0xff]
    %v86 = vld [vmem:[%s0 + $0xd8] sm:$0xff]
    %v87 = vld [vmem:[%s0 + $0xe0] sm:$0xff]
    %v88 = vld [vmem:[%s0 + $0xe8] sm:$0xff]
    %v89 = vld [vmem:[%s0 + $0xf0] sm:$0xff]
    %v90 = vld [vmem:[%s0 + $0xf8] sm:$0xff]
    %v91 = vld [vmem:[%s0 + $0x100] sm:$0xff]
    %v92 = vld [vmem:[%s0 + $0x108] sm:$0xff]
    %v93 = vld [vmem:[%s0 + $0x110] sm:$0xff]
    %v94 = vld [vmem:[%s0 + $0x118] sm:$0xff]
    %v95 = vld [vmem:[%s0 + $0x120] sm:$0xff]
    %v96 = vld [vmem:[%s0 + $0x128] sm:$0xff]
    %v97 = vld [vmem:[%s0 + $0x130] sm:$0xff]
    %v98 = vld [vmem:[%s0 + $0x138] sm:$0xff]
    %v99 = vld [vmem:[%s0 + $0x140] sm:$0xff]
    %v100 = vld [vmem:[%s0 + $0x148] sm:$0xff]
    %v101 = vld [vmem:[%s0 + $0x150] sm:$0xff]
    %v102 = vld [vmem:[%s0 + $0x158] sm:$0xff]
    %v103 = vld [vmem:[%s0 + $0x160] sm:$0xff]
    %v104 = vld [vmem:[%s0 + $0x168] sm:$0xff]
    %v105 = vld [vmem:[%s0 + $0x170] sm:$0xff]
    %v106 = vld [vmem:[%s0 + $0x178] sm:$0xff]
    %v107 = vld [vmem:[%s0 + $0x180] sm:$0xff]
    %v108 = vld [vmem:[%s0 + $0x188] sm:$0xff]
    %v109 = vld [vmem:[%s0 + $0x190] sm:$0xff]
    %v110 = vld [vmem:[%s0 + $0x198] sm:$0xff]
    %v111 = vld [vmem:[%s0 + $0x1a0] sm:$0xff]
    %v112 = vld [vmem:[%s0 + $0x1a8] sm:$0xff]
    %v113 = vld [vmem:[%s0 + $0x1b0] sm:$0xff]
    %v114 = vld [vmem:[%s0 + $0x1b8] sm:$0xff]
    %v115 = vld [vmem:[%s0 + $0x1c0] sm:$0xff]
    %v116 = vld [vmem:[%s0 + $0x1c8] sm:$0xff]
    %v117 = vld [vmem:[%s0 + $0x1d0] sm:$0xff]
    %v118 = vld [vmem:[%s0 + $0x1d8] sm:$0xff]
    %v119 = vld [vmem:[%s0 + $0x1e0] sm:$0xff]
    %v120 = vld [vmem:[%s0 + $0x1e8] sm:$0xff]
    %v121 = vld [vmem:[%s0 + $0x1f0] sm:$0xff]
    %v122 = vld [vmem:[%s0 + $0x1f8] sm:$0xff]
    %v123 = vld [vmem:[%s2] sm:$0xff]
    %v124 = vld [vmem:[%s2 + $0x8] sm:$0xff]
    %v125 = vld [vmem:[%s2 + $0x10] sm:$0xff]
    %v126 = vld [vmem:[%s2 + $0x18] sm:$0xff]
    %v127 = vld [vmem:[%s3] sm:$0x1]
    %v129 = vlaneseq
    %v130 = vshrl.u32 %v129, 7
    %v131 = vsub.s32 0, %v130
    %v132 = vrot.slane %v127, %v131
    %vm134 = vcmask 261120
    %v136 = vsel %vm134, %v59, 0
    %v139 = vsel %vm134, %v60, 0
    %v142 = vsel %vm134, %v61, 0
    %v145 = vsel %vm134, %v62, 0
    %v148 = vsel %vm134, %v63, 0
    %v151 = vsel %vm134, %v64, 0
    %v154 = vsel %vm134, %v65, 0
    %v157 = vsel %vm134, %v66, 0
    %v160 = vsel %vm134, %v67, 0
    %v163 = vsel %vm134, %v68, 0
    %v166 = vsel %vm134, %v69, 0
    %v169 = vsel %vm134, %v70, 0
    %v172 = vsel %vm134, %v71, 0
    %v175 = vsel %vm134, %v72, 0
    %v178 = vsel %vm134, %v73, 0
    %v181 = vsel %vm134, %v74, 0
    %v184 = vsel %vm134, %v75, 0
    %v187 = vsel %vm134, %v76, 0
    %v190 = vsel %vm134, %v77, 0
    %v193 = vsel %vm134, %v78, 0
    %v196 = vsel %vm134, %v79, 0
    %v199 = vsel %vm134, %v80, 0
    %v202 = vsel %vm134, %v81, 0
    %v205 = vsel %vm134, %v82, 0
    %v208 = vsel %vm134, %v83, 0
    %v211 = vsel %vm134, %v84, 0
    %v214 = vsel %vm134, %v85, 0
    %v217 = vsel %vm134, %v86, 0
    %v220 = vsel %vm134, %v87, 0
    %v223 = vsel %vm134, %v88, 0
    %v226 = vsel %vm134, %v89, 0
    %v229 = vsel %vm134, %v90, 0
    %v232 = vsel %vm134, %v91, 0
    %v235 = vsel %vm134, %v92, 0
    %v238 = vsel %vm134, %v93, 0
    %v241 = vsel %vm134, %v94, 0
    %v244 = vsel %vm134, %v95, 0
    %v247 = vsel %vm134, %v96, 0
    %v250 = vsel %vm134, %v97, 0
    %v253 = vsel %vm134, %v98, 0
    %v256 = vsel %vm134, %v99, 0
    %v259 = vsel %vm134, %v100, 0
    %v262 = vsel %vm134, %v101, 0
    %v265 = vsel %vm134, %v102, 0
    %v268 = vsel %vm134, %v103, 0
    %v271 = vsel %vm134, %v104, 0
    %v274 = vsel %vm134, %v105, 0
    %v277 = vsel %vm134, %v106, 0
    %v280 = vsel %vm134, %v107, 0
    %v283 = vsel %vm134, %v108, 0
    %v286 = vsel %vm134, %v109, 0
    %v289 = vsel %vm134, %v110, 0
    %v292 = vsel %vm134, %v111, 0
    %v295 = vsel %vm134, %v112, 0
    %v298 = vsel %vm134, %v113, 0
    %v301 = vsel %vm134, %v114, 0
    %v304 = vsel %vm134, %v115, 0
    %v307 = vsel %vm134, %v116, 0
    %v310 = vsel %vm134, %v117, 0
    %v313 = vsel %vm134, %v118, 0
    %v316 = vsel %vm134, %v119, 0
    %v319 = vsel %vm134, %v120, 0
    %v322 = vsel %vm134, %v121, 0
    %v325 = vsel %vm134, %v122, 0
    %327 = vmatprep.subr.mxu0 0.0
    %328 = vmatpush1.msra.mxu0 0.0
    %329 = vmatprep.subr.mxu0 0.0
    %330 = vmatpush1.msra.mxu0 0.0
    %331 = vmatprep.subr.mxu0 0.0
    %332 = vmatpush1.msra.mxu0 0.0
    %333 = vmatprep.subr.mxu0 0.0
    %334 = vmatpush1.msra.mxu0 0.0
    %335 = vmatprep.subr.mxu0 0.0
    %336 = vmatpush1.msra.mxu0 0.0
    %337 = vmatprep.subr.mxu0 0.0
    %338 = vmatpush1.msra.mxu0 0.0
    %339 = vmatprep.subr.mxu0 0.0
    %340 = vmatpush1.msra.mxu0 0.0
    %341 = vmatprep.subr.mxu0 0.0
    %342 = vmatpush1.msra.mxu0 0.0
    %343 = vmatprep.subr.mxu0 0.0
    %344 = vmatpush1.msra.mxu0 0.0
    %345 = vmatprep.subr.mxu0 0.0
    %346 = vmatpush1.msra.mxu0 0.0
    %347 = vmatprep.subr.mxu0 0.0
    %348 = vmatpush1.msra.mxu0 0.0
    %349 = vmatprep.subr.mxu0 0.0
    %350 = vmatpush1.msra.mxu0 0.0
    %351 = vmatprep.subr.mxu0 0.0
    %352 = vmatpush1.msra.mxu0 %v126
    %353 = vmatprep.subr.mxu0 0.0
    %354 = vmatpush1.msra.mxu0 %v125
    %355 = vmatprep.subr.mxu0 0.0
    %356 = vmatpush1.msra.mxu0 %v124
    %357 = vmatprep.subr.mxu0 0.0
    %358 = vmatpush1.msra.mxu0 %v123
    %359 = vmatprep.subr.mxu0 0.0
    %360 = vmatpush2.msra.mxu0 0.0
    %361 = vmatprep.subr.mxu0 0.0
    %362 = vmatpush2.msra.mxu0 0.0
    %363 = vmatprep.subr.mxu0 0.0
    %364 = vmatpush2.msra.mxu0 0.0
    %365 = vmatprep.subr.mxu0 0.0
    %366 = vmatpush2.msra.mxu0 0.0
    %367 = vmatprep.subr.mxu0 0.0
    %368 = vmatpush2.msra.mxu0 0.0
    %369 = vmatprep.subr.mxu0 0.0
    %370 = vmatpush2.msra.mxu0 0.0
    %371 = vmatprep.subr.mxu0 0.0
    %372 = vmatpush2.msra.mxu0 0.0
    %373 = vmatprep.subr.mxu0 0.0
    %374 = vmatpush2.msra.mxu0 0.0
    %375 = vmatprep.subr.mxu0 0.0
    %376 = vmatpush2.msra.mxu0 0.0
    %377 = vmatprep.subr.mxu0 0.0
    %378 = vmatpush2.msra.mxu0 0.0
    %379 = vmatprep.subr.mxu0 0.0
    %380 = vmatpush2.msra.mxu0 0.0
    %381 = vmatprep.subr.mxu0 0.0
    %382 = vmatpush2.msra.mxu0 0.0
    %383 = vmatprep.subr.mxu0 0.0
    %384 = vmatpush2.msra.mxu0 0.0
    %385 = vmatprep.subr.mxu0 0.0
    %386 = vmatpush2.msra.mxu0 0.0
    %387 = vmatprep.subr.mxu0 0.0
    %388 = vmatpush2.msra.mxu0 0.0
    %389 = vmatprep.subr.mxu0 0.0
    %390 = vmatpush2.msra.mxu0 0.0
    %391 = vmatprep.mubr.f32.mxu0 0.0
    %392 = vmatmul.mubr.f32.gmra.mxu0 %v136
    %v393 = vpop.f32.mrf.mxu0
    %v394 = vadd.f32 %v132, %v393
    %v395 = vpop.f32.mrf.mxu0
    %396 = vmatprep.mubr.f32.mxu0 0.0
    %397 = vmatmul.mubr.f32.gmra.mxu0 %v139
    %v398 = vpop.f32.mrf.mxu0
    %v399 = vadd.f32 %v132, %v398
    %v400 = vpop.f32.mrf.mxu0
    %401 = vmatprep.mubr.f32.mxu0 0.0
    %402 = vmatmul.mubr.f32.gmra.mxu0 %v142
    %v403 = vpop.f32.mrf.mxu0
    %v404 = vadd.f32 %v132, %v403
    %v405 = vpop.f32.mrf.mxu0
    %406 = vmatprep.mubr.f32.mxu0 0.0
    %407 = vmatmul.mubr.f32.gmra.mxu0 %v145
    %v408 = vpop.f32.mrf.mxu0
    %v409 = vadd.f32 %v132, %v408
    %v410 = vpop.f32.mrf.mxu0
    %411 = vmatprep.mubr.f32.mxu0 0.0
    %412 = vmatmul.mubr.f32.gmra.mxu0 %v148
    %v413 = vpop.f32.mrf.mxu0
    %v414 = vadd.f32 %v132, %v413
    %v415 = vpop.f32.mrf.mxu0
    %416 = vmatprep.mubr.f32.mxu0 0.0
    %417 = vmatmul.mubr.f32.gmra.mxu0 %v151
    %v418 = vpop.f32.mrf.mxu0
    %v419 = vadd.f32 %v132, %v418
    %v420 = vpop.f32.mrf.mxu0
    %421 = vmatprep.mubr.f32.mxu0 0.0
    %422 = vmatmul.mubr.f32.gmra.mxu0 %v154
    %v423 = vpop.f32.mrf.mxu0
    %v424 = vadd.f32 %v132, %v423
    %v425 = vpop.f32.mrf.mxu0
    %426 = vmatprep.mubr.f32.mxu0 0.0
    %427 = vmatmul.mubr.f32.gmra.mxu0 %v157
    %v428 = vpop.f32.mrf.mxu0
    %v429 = vadd.f32 %v132, %v428
    %v430 = vpop.f32.mrf.mxu0
    %431 = vmatprep.mubr.f32.mxu0 0.0
    %432 = vmatmul.mubr.f32.gmra.mxu0 %v160
    %v433 = vpop.f32.mrf.mxu0
    %v434 = vadd.f32 %v132, %v433
    %v435 = vpop.f32.mrf.mxu0
    %436 = vmatprep.mubr.f32.mxu0 0.0
    %437 = vmatmul.mubr.f32.gmra.mxu0 %v163
    %v438 = vpop.f32.mrf.mxu0
    %v439 = vadd.f32 %v132, %v438
    %v440 = vpop.f32.mrf.mxu0
    %441 = vmatprep.mubr.f32.mxu0 0.0
    %442 = vmatmul.mubr.f32.gmra.mxu0 %v166
    %v443 = vpop.f32.mrf.mxu0
    %v444 = vadd.f32 %v132, %v443
    %v445 = vpop.f32.mrf.mxu0
    %446 = vmatprep.mubr.f32.mxu0 0.0
    %447 = vmatmul.mubr.f32.gmra.mxu0 %v169
    %v448 = vpop.f32.mrf.mxu0
    %v449 = vadd.f32 %v132, %v448
    %v450 = vpop.f32.mrf.mxu0
    %451 = vmatprep.mubr.f32.mxu0 0.0
    %452 = vmatmul.mubr.f32.gmra.mxu0 %v172
    %v453 = vpop.f32.mrf.mxu0
    %v454 = vadd.f32 %v132, %v453
    %v455 = vpop.f32.mrf.mxu0
    %456 = vmatprep.mubr.f32.mxu0 0.0
    %457 = vmatmul.mubr.f32.gmra.mxu0 %v175
    %v458 = vpop.f32.mrf.mxu0
    %v459 = vadd.f32 %v132, %v458
    %v460 = vpop.f32.mrf.mxu0
    %461 = vmatprep.mubr.f32.mxu0 0.0
    %462 = vmatmul.mubr.f32.gmra.mxu0 %v178
    %v463 = vpop.f32.mrf.mxu0
    %v464 = vadd.f32 %v132, %v463
    %v465 = vpop.f32.mrf.mxu0
    %466 = vmatprep.mubr.f32.mxu0 0.0
    %467 = vmatmul.mubr.f32.gmra.mxu0 %v181
    %v468 = vpop.f32.mrf.mxu0
    %v469 = vadd.f32 %v132, %v468
    %v470 = vpop.f32.mrf.mxu0
    %471 = vmatprep.mubr.f32.mxu0 0.0
    %472 = vmatmul.mubr.f32.gmra.mxu0 %v184
    %v473 = vpop.f32.mrf.mxu0
    %v474 = vadd.f32 %v132, %v473
    %v475 = vpop.f32.mrf.mxu0
    %476 = vmatprep.mubr.f32.mxu0 0.0
    %477 = vmatmul.mubr.f32.gmra.mxu0 %v187
    %v478 = vpop.f32.mrf.mxu0
    %v479 = vadd.f32 %v132, %v478
    %v480 = vpop.f32.mrf.mxu0
    %481 = vmatprep.mubr.f32.mxu0 0.0
    %482 = vmatmul.mubr.f32.gmra.mxu0 %v190
    %v483 = vpop.f32.mrf.mxu0
    %v484 = vadd.f32 %v132, %v483
    %v485 = vpop.f32.mrf.mxu0
    %486 = vmatprep.mubr.f32.mxu0 0.0
    %487 = vmatmul.mubr.f32.gmra.mxu0 %v193
    %v488 = vpop.f32.mrf.mxu0
    %v489 = vadd.f32 %v132, %v488
    %v490 = vpop.f32.mrf.mxu0
    %491 = vmatprep.mubr.f32.mxu0 0.0
    %492 = vmatmul.mubr.f32.gmra.mxu0 %v196
    %v493 = vpop.f32.mrf.mxu0
    %v494 = vadd.f32 %v132, %v493
    %v495 = vpop.f32.mrf.mxu0
    %496 = vmatprep.mubr.f32.mxu0 0.0
    %497 = vmatmul.mubr.f32.gmra.mxu0 %v199
    %v498 = vpop.f32.mrf.mxu0
    %v499 = vadd.f32 %v132, %v498
    %v500 = vpop.f32.mrf.mxu0
    %501 = vmatprep.mubr.f32.mxu0 0.0
    %502 = vmatmul.mubr.f32.gmra.mxu0 %v202
    %v503 = vpop.f32.mrf.mxu0
    %v504 = vadd.f32 %v132, %v503
    %v505 = vpop.f32.mrf.mxu0
    %506 = vmatprep.mubr.f32.mxu0 0.0
    %507 = vmatmul.mubr.f32.gmra.mxu0 %v205
    %v508 = vpop.f32.mrf.mxu0
    %v509 = vadd.f32 %v132, %v508
    %v510 = vpop.f32.mrf.mxu0
    %511 = vmatprep.mubr.f32.mxu0 0.0
    %512 = vmatmul.mubr.f32.gmra.mxu0 %v208
    %v513 = vpop.f32.mrf.mxu0
    %v514 = vadd.f32 %v132, %v513
    %v515 = vpop.f32.mrf.mxu0
    %516 = vmatprep.mubr.f32.mxu0 0.0
    %517 = vmatmul.mubr.f32.gmra.mxu0 %v211
    %v518 = vpop.f32.mrf.mxu0
    %v519 = vadd.f32 %v132, %v518
    %v520 = vpop.f32.mrf.mxu0
    %521 = vmatprep.mubr.f32.mxu0 0.0
    %522 = vmatmul.mubr.f32.gmra.mxu0 %v214
    %v523 = vpop.f32.mrf.mxu0
    %v524 = vadd.f32 %v132, %v523
    %v525 = vpop.f32.mrf.mxu0
    %526 = vmatprep.mubr.f32.mxu0 0.0
    %527 = vmatmul.mubr.f32.gmra.mxu0 %v217
    %v528 = vpop.f32.mrf.mxu0
    %v529 = vadd.f32 %v132, %v528
    %v530 = vpop.f32.mrf.mxu0
    %531 = vmatprep.mubr.f32.mxu0 0.0
    %532 = vmatmul.mubr.f32.gmra.mxu0 %v220
    %v533 = vpop.f32.mrf.mxu0
    %v534 = vadd.f32 %v132, %v533
    %v535 = vpop.f32.mrf.mxu0
    %536 = vmatprep.mubr.f32.mxu0 0.0
    %537 = vmatmul.mubr.f32.gmra.mxu0 %v223
    %v538 = vpop.f32.mrf.mxu0
    %v539 = vadd.f32 %v132, %v538
    %v540 = vpop.f32.mrf.mxu0
    %541 = vmatprep.mubr.f32.mxu0 0.0
    %542 = vmatmul.mubr.f32.gmra.mxu0 %v226
    %v543 = vpop.f32.mrf.mxu0
    %v544 = vadd.f32 %v132, %v543
    %v545 = vpop.f32.mrf.mxu0
    %546 = vmatprep.mubr.f32.mxu0 0.0
    %547 = vmatmul.mubr.f32.gmra.mxu0 %v229
    %v548 = vpop.f32.mrf.mxu0
    %v549 = vadd.f32 %v132, %v548
    %v550 = vpop.f32.mrf.mxu0
    %551 = vmatprep.mubr.f32.mxu0 0.0
    %552 = vmatmul.mubr.f32.gmra.mxu0 %v232
    %v553 = vpop.f32.mrf.mxu0
    %v554 = vadd.f32 %v132, %v553
    %v555 = vpop.f32.mrf.mxu0
    %556 = vmatprep.mubr.f32.mxu0 0.0
    %557 = vmatmul.mubr.f32.gmra.mxu0 %v235
    %v558 = vpop.f32.mrf.mxu0
    %v559 = vadd.f32 %v132, %v558
    %v560 = vpop.f32.mrf.mxu0
    %561 = vmatprep.mubr.f32.mxu0 0.0
    %562 = vmatmul.mubr.f32.gmra.mxu0 %v238
    %v563 = vpop.f32.mrf.mxu0
    %v564 = vadd.f32 %v132, %v563
    %v565 = vpop.f32.mrf.mxu0
    %566 = vmatprep.mubr.f32.mxu0 0.0
    %567 = vmatmul.mubr.f32.gmra.mxu0 %v241
    %v568 = vpop.f32.mrf.mxu0
    %v569 = vadd.f32 %v132, %v568
    %v570 = vpop.f32.mrf.mxu0
    %571 = vmatprep.mubr.f32.mxu0 0.0
    %572 = vmatmul.mubr.f32.gmra.mxu0 %v244
    %v573 = vpop.f32.mrf.mxu0
    %v574 = vadd.f32 %v132, %v573
    %v575 = vpop.f32.mrf.mxu0
    %576 = vmatprep.mubr.f32.mxu0 0.0
    %577 = vmatmul.mubr.f32.gmra.mxu0 %v247
    %v578 = vpop.f32.mrf.mxu0
    %v579 = vadd.f32 %v132, %v578
    %v580 = vpop.f32.mrf.mxu0
    %581 = vmatprep.mubr.f32.mxu0 0.0
    %582 = vmatmul.mubr.f32.gmra.mxu0 %v250
    %v583 = vpop.f32.mrf.mxu0
    %v584 = vadd.f32 %v132, %v583
    %v585 = vpop.f32.mrf.mxu0
    %586 = vmatprep.mubr.f32.mxu0 0.0
    %587 = vmatmul.mubr.f32.gmra.mxu0 %v253
    %v588 = vpop.f32.mrf.mxu0
    %v589 = vadd.f32 %v132, %v588
    %v590 = vpop.f32.mrf.mxu0
    %591 = vmatprep.mubr.f32.mxu0 0.0
    %592 = vmatmul.mubr.f32.gmra.mxu0 %v256
    %v593 = vpop.f32.mrf.mxu0
    %v594 = vadd.f32 %v132, %v593
    %v595 = vpop.f32.mrf.mxu0
    %596 = vmatprep.mubr.f32.mxu0 0.0
    %597 = vmatmul.mubr.f32.gmra.mxu0 %v259
    %v598 = vpop.f32.mrf.mxu0
    %v599 = vadd.f32 %v132, %v598
    %v600 = vpop.f32.mrf.mxu0
    %601 = vmatprep.mubr.f32.mxu0 0.0
    %602 = vmatmul.mubr.f32.gmra.mxu0 %v262
    %v603 = vpop.f32.mrf.mxu0
    %v604 = vadd.f32 %v132, %v603
    %v605 = vpop.f32.mrf.mxu0
    %606 = vmatprep.mubr.f32.mxu0 0.0
    %607 = vmatmul.mubr.f32.gmra.mxu0 %v265
    %v608 = vpop.f32.mrf.mxu0
    %v609 = vadd.f32 %v132, %v608
    %v610 = vpop.f32.mrf.mxu0
    %611 = vmatprep.mubr.f32.mxu0 0.0
    %612 = vmatmul.mubr.f32.gmra.mxu0 %v268
    %v613 = vpop.f32.mrf.mxu0
    %v614 = vadd.f32 %v132, %v613
    %v615 = vpop.f32.mrf.mxu0
    %616 = vmatprep.mubr.f32.mxu0 0.0
    %617 = vmatmul.mubr.f32.gmra.mxu0 %v271
    %v618 = vpop.f32.mrf.mxu0
    %v619 = vadd.f32 %v132, %v618
    %v620 = vpop.f32.mrf.mxu0
    %621 = vmatprep.mubr.f32.mxu0 0.0
    %622 = vmatmul.mubr.f32.gmra.mxu0 %v274
    %v623 = vpop.f32.mrf.mxu0
    %v624 = vadd.f32 %v132, %v623
    %v625 = vpop.f32.mrf.mxu0
    %626 = vmatprep.mubr.f32.mxu0 0.0
    %627 = vmatmul.mubr.f32.gmra.mxu0 %v277
    %v628 = vpop.f32.mrf.mxu0
    %v629 = vadd.f32 %v132, %v628
    %v630 = vpop.f32.mrf.mxu0
    %631 = vmatprep.mubr.f32.mxu0 0.0
    %632 = vmatmul.mubr.f32.gmra.mxu0 %v280
    %v633 = vpop.f32.mrf.mxu0
    %v634 = vadd.f32 %v132, %v633
    %v635 = vpop.f32.mrf.mxu0
    %636 = vmatprep.mubr.f32.mxu0 0.0
    %637 = vmatmul.mubr.f32.gmra.mxu0 %v283
    %v638 = vpop.f32.mrf.mxu0
    %v639 = vadd.f32 %v132, %v638
    %v640 = vpop.f32.mrf.mxu0
    %641 = vmatprep.mubr.f32.mxu0 0.0
    %642 = vmatmul.mubr.f32.gmra.mxu0 %v286
    %v643 = vpop.f32.mrf.mxu0
    %v644 = vadd.f32 %v132, %v643
    %v645 = vpop.f32.mrf.mxu0
    %646 = vmatprep.mubr.f32.mxu0 0.0
    %647 = vmatmul.mubr.f32.gmra.mxu0 %v289
    %v648 = vpop.f32.mrf.mxu0
    %v649 = vadd.f32 %v132, %v648
    %v650 = vpop.f32.mrf.mxu0
    %651 = vmatprep.mubr.f32.mxu0 0.0
    %652 = vmatmul.mubr.f32.gmra.mxu0 %v292
    %v653 = vpop.f32.mrf.mxu0
    %v654 = vadd.f32 %v132, %v653
    %v655 = vpop.f32.mrf.mxu0
    %656 = vmatprep.mubr.f32.mxu0 0.0
    %657 = vmatmul.mubr.f32.gmra.mxu0 %v295
    %v658 = vpop.f32.mrf.mxu0
    %v659 = vadd.f32 %v132, %v658
    %v660 = vpop.f32.mrf.mxu0
    %661 = vmatprep.mubr.f32.mxu0 0.0
    %662 = vmatmul.mubr.f32.gmra.mxu0 %v298
    %v663 = vpop.f32.mrf.mxu0
    %v664 = vadd.f32 %v132, %v663
    %v665 = vpop.f32.mrf.mxu0
    %666 = vmatprep.mubr.f32.mxu0 0.0
    %667 = vmatmul.mubr.f32.gmra.mxu0 %v301
    %v668 = vpop.f32.mrf.mxu0
    %v669 = vadd.f32 %v132, %v668
    %v670 = vpop.f32.mrf.mxu0
    %671 = vmatprep.mubr.f32.mxu0 0.0
    %672 = vmatmul.mubr.f32.gmra.mxu0 %v304
    %v673 = vpop.f32.mrf.mxu0
    %v674 = vadd.f32 %v132, %v673
    %v675 = vpop.f32.mrf.mxu0
    %676 = vmatprep.mubr.f32.mxu0 0.0
    %677 = vmatmul.mubr.f32.gmra.mxu0 %v307
    %v678 = vpop.f32.mrf.mxu0
    %v679 = vadd.f32 %v132, %v678
    %v680 = vpop.f32.mrf.mxu0
    %681 = vmatprep.mubr.f32.mxu0 0.0
    %682 = vmatmul.mubr.f32.gmra.mxu0 %v310
    %v683 = vpop.f32.mrf.mxu0
    %v684 = vadd.f32 %v132, %v683
    %v685 = vpop.f32.mrf.mxu0
    %686 = vmatprep.mubr.f32.mxu0 0.0
    %687 = vmatmul.mubr.f32.gmra.mxu0 %v313
    %v688 = vpop.f32.mrf.mxu0
    %v689 = vadd.f32 %v132, %v688
    %v690 = vpop.f32.mrf.mxu0
    %691 = vmatprep.mubr.f32.mxu0 0.0
    %692 = vmatmul.mubr.f32.gmra.mxu0 %v316
    %v693 = vpop.f32.mrf.mxu0
    %v694 = vadd.f32 %v132, %v693
    %v695 = vpop.f32.mrf.mxu0
    %696 = vmatprep.mubr.f32.mxu0 0.0
    %697 = vmatmul.mubr.f32.gmra.mxu0 %v319
    %v698 = vpop.f32.mrf.mxu0
    %v699 = vadd.f32 %v132, %v698
    %v700 = vpop.f32.mrf.mxu0
    %701 = vmatprep.mubr.f32.mxu0 0.0
    %702 = vmatmul.mubr.f32.gmra.mxu0 %v322
    %v703 = vpop.f32.mrf.mxu0
    %v704 = vadd.f32 %v132, %v703
    %v705 = vpop.f32.mrf.mxu0
    %706 = vmatprep.mubr.f32.mxu0 0.0
    %707 = vmatmul.mubr.f32.gmra.mxu0 %v325
    %v708 = vpop.f32.mrf.mxu0
    %v709 = vadd.f32 %v132, %v708
    %v710 = vpop.f32.mrf.mxu0
    %711 = vdwg.mxu0
    %v712 = vmax.f32 %v394, 0.0
    %v713 = vmax.f32 %v399, 0.0
    %v714 = vmax.f32 %v404, 0.0
    %v715 = vmax.f32 %v409, 0.0
    %v716 = vmax.f32 %v414, 0.0
    %v717 = vmax.f32 %v419, 0.0
    %v718 = vmax.f32 %v424, 0.0
    %v719 = vmax.f32 %v429, 0.0
    %v720 = vmax.f32 %v434, 0.0
    %v721 = vmax.f32 %v439, 0.0
    %v722 = vmax.f32 %v444, 0.0
    %v723 = vmax.f32 %v449, 0.0
    %v724 = vmax.f32 %v454, 0.0
    %v725 = vmax.f32 %v459, 0.0
    %v726 = vmax.f32 %v464, 0.0
    %v727 = vmax.f32 %v469, 0.0
    %v728 = vmax.f32 %v474, 0.0
    %v729 = vmax.f32 %v479, 0.0
    %v730 = vmax.f32 %v484, 0.0
    %v731 = vmax.f32 %v489, 0.0
    %v732 = vmax.f32 %v494, 0.0
    %v733 = vmax.f32 %v499, 0.0
    %v734 = vmax.f32 %v504, 0.0
    %v735 = vmax.f32 %v509, 0.0
    %v736 = vmax.f32 %v514, 0.0
    %v737 = vmax.f32 %v519, 0.0
    %v738 = vmax.f32 %v524, 0.0
    %v739 = vmax.f32 %v529, 0.0
    %v740 = vmax.f32 %v534, 0.0
    %v741 = vmax.f32 %v539, 0.0
    %v742 = vmax.f32 %v544, 0.0
    %v743 = vmax.f32 %v549, 0.0
    %v744 = vmax.f32 %v554, 0.0
    %v745 = vmax.f32 %v559, 0.0
    %v746 = vmax.f32 %v564, 0.0
    %v747 = vmax.f32 %v569, 0.0
    %v748 = vmax.f32 %v574, 0.0
    %v749 = vmax.f32 %v579, 0.0
    %v750 = vmax.f32 %v584, 0.0
    %v751 = vmax.f32 %v589, 0.0
    %v752 = vmax.f32 %v594, 0.0
    %v753 = vmax.f32 %v599, 0.0
    %v754 = vmax.f32 %v604, 0.0
    %v755 = vmax.f32 %v609, 0.0
    %v756 = vmax.f32 %v614, 0.0
    %v757 = vmax.f32 %v619, 0.0
    %v758 = vmax.f32 %v624, 0.0
    %v759 = vmax.f32 %v629, 0.0
    %v760 = vmax.f32 %v634, 0.0
    %v761 = vmax.f32 %v639, 0.0
    %v762 = vmax.f32 %v644, 0.0
    %v763 = vmax.f32 %v649, 0.0
    %v764 = vmax.f32 %v654, 0.0
    %v765 = vmax.f32 %v659, 0.0
    %v766 = vmax.f32 %v664, 0.0
    %v767 = vmax.f32 %v669, 0.0
    %v768 = vmax.f32 %v674, 0.0
    %v769 = vmax.f32 %v679, 0.0
    %v770 = vmax.f32 %v684, 0.0
    %v771 = vmax.f32 %v689, 0.0
    %v772 = vmax.f32 %v694, 0.0
    %v773 = vmax.f32 %v699, 0.0
    %v774 = vmax.f32 %v704, 0.0
    %v775 = vmax.f32 %v709, 0.0
    %v776 = vsel %vm134, %v712, 0.0
    %777 = vadd.xlane.f32.xlu0 %v776
    %v778 = vpop.xlane.xlu0 %777
    %v779 = vsel %vm134, %v713, 0.0
    %780 = vadd.xlane.f32.xlu0 %v779
    %v781 = vpop.xlane.xlu0 %780
    %v782 = vsel %vm134, %v714, 0.0
    %783 = vadd.xlane.f32.xlu0 %v782
    %v784 = vpop.xlane.xlu0 %783
    %v785 = vsel %vm134, %v715, 0.0
    %786 = vadd.xlane.f32.xlu0 %v785
    %v787 = vpop.xlane.xlu0 %786
    %v788 = vsel %vm134, %v716, 0.0
    %789 = vadd.xlane.f32.xlu0 %v788
    %v790 = vpop.xlane.xlu0 %789
    %v791 = vsel %vm134, %v717, 0.0
    %792 = vadd.xlane.f32.xlu0 %v791
    %v793 = vpop.xlane.xlu0 %792
    %v794 = vsel %vm134, %v718, 0.0
    %795 = vadd.xlane.f32.xlu0 %v794
    %v796 = vpop.xlane.xlu0 %795
    %v797 = vsel %vm134, %v719, 0.0
    %798 = vadd.xlane.f32.xlu0 %v797
    %v799 = vpop.xlane.xlu0 %798
    %v800 = vsel %vm134, %v720, 0.0
    %801 = vadd.xlane.f32.xlu0 %v800
    %v802 = vpop.xlane.xlu0 %801
    %v803 = vsel %vm134, %v721, 0.0
    %804 = vadd.xlane.f32.xlu0 %v803
    %v805 = vpop.xlane.xlu0 %804
    %v806 = vsel %vm134, %v722, 0.0
    %807 = vadd.xlane.f32.xlu0 %v806
    %v808 = vpop.xlane.xlu0 %807
    %v809 = vsel %vm134, %v723, 0.0
    %810 = vadd.xlane.f32.xlu0 %v809
    %v811 = vpop.xlane.xlu0 %810
    %v812 = vsel %vm134, %v724, 0.0
    %813 = vadd.xlane.f32.xlu0 %v812
    %v814 = vpop.xlane.xlu0 %813
    %v815 = vsel %vm134, %v725, 0.0
    %816 = vadd.xlane.f32.xlu0 %v815
    %v817 = vpop.xlane.xlu0 %816
    %v818 = vsel %vm134, %v726, 0.0
    %819 = vadd.xlane.f32.xlu0 %v818
    %v820 = vpop.xlane.xlu0 %819
    %v821 = vsel %vm134, %v727, 0.0
    %822 = vadd.xlane.f32.xlu0 %v821
    %v823 = vpop.xlane.xlu0 %822
    %v824 = vsel %vm134, %v728, 0.0
    %825 = vadd.xlane.f32.xlu0 %v824
    %v826 = vpop.xlane.xlu0 %825
    %v827 = vsel %vm134, %v729, 0.0
    %828 = vadd.xlane.f32.xlu0 %v827
    %v829 = vpop.xlane.xlu0 %828
    %v830 = vsel %vm134, %v730, 0.0
    %831 = vadd.xlane.f32.xlu0 %v830
    %v832 = vpop.xlane.xlu0 %831
    %v833 = vsel %vm134, %v731, 0.0
    %834 = vadd.xlane.f32.xlu0 %v833
    %v835 = vpop.xlane.xlu0 %834
    %v836 = vsel %vm134, %v732, 0.0
    %837 = vadd.xlane.f32.xlu0 %v836
    %v838 = vpop.xlane.xlu0 %837
    %v839 = vsel %vm134, %v733, 0.0
    %840 = vadd.xlane.f32.xlu0 %v839
    %v841 = vpop.xlane.xlu0 %840
    %v842 = vsel %vm134, %v734, 0.0
    %843 = vadd.xlane.f32.xlu0 %v842
    %v844 = vpop.xlane.xlu0 %843
    %v845 = vsel %vm134, %v735, 0.0
    %846 = vadd.xlane.f32.xlu0 %v845
    %v847 = vpop.xlane.xlu0 %846
    %v848 = vsel %vm134, %v736, 0.0
    %849 = vadd.xlane.f32.xlu0 %v848
    %v850 = vpop.xlane.xlu0 %849
    %v851 = vsel %vm134, %v737, 0.0
    %852 = vadd.xlane.f32.xlu0 %v851
    %v853 = vpop.xlane.xlu0 %852
    %v854 = vsel %vm134, %v738, 0.0
    %855 = vadd.xlane.f32.xlu0 %v854
    %v856 = vpop.xlane.xlu0 %855
    %v857 = vsel %vm134, %v739, 0.0
    %858 = vadd.xlane.f32.xlu0 %v857
    %v859 = vpop.xlane.xlu0 %858
    %v860 = vsel %vm134, %v740, 0.0
    %861 = vadd.xlane.f32.xlu0 %v860
    %v862 = vpop.xlane.xlu0 %861
    %v863 = vsel %vm134, %v741, 0.0
    %864 = vadd.xlane.f32.xlu0 %v863
    %v865 = vpop.xlane.xlu0 %864
    %v866 = vsel %vm134, %v742, 0.0
    %867 = vadd.xlane.f32.xlu0 %v866
    %v868 = vpop.xlane.xlu0 %867
    %v869 = vsel %vm134, %v743, 0.0
    %870 = vadd.xlane.f32.xlu0 %v869
    %v871 = vpop.xlane.xlu0 %870
    %v872 = vsel %vm134, %v744, 0.0
    %873 = vadd.xlane.f32.xlu0 %v872
    %v874 = vpop.xlane.xlu0 %873
    %v875 = vsel %vm134, %v745, 0.0
    %876 = vadd.xlane.f32.xlu0 %v875
    %v877 = vpop.xlane.xlu0 %876
    %v878 = vsel %vm134, %v746, 0.0
    %879 = vadd.xlane.f32.xlu0 %v878
    %v880 = vpop.xlane.xlu0 %879
    %v881 = vsel %vm134, %v747, 0.0
    %882 = vadd.xlane.f32.xlu0 %v881
    %v883 = vpop.xlane.xlu0 %882
    %v884 = vsel %vm134, %v748, 0.0
    %885 = vadd.xlane.f32.xlu0 %v884
    %v886 = vpop.xlane.xlu0 %885
    %v887 = vsel %vm134, %v749, 0.0
    %888 = vadd.xlane.f32.xlu0 %v887
    %v889 = vpop.xlane.xlu0 %888
    %v890 = vsel %vm134, %v750, 0.0
    %891 = vadd.xlane.f32.xlu0 %v890
    %v892 = vpop.xlane.xlu0 %891
    %v893 = vsel %vm134, %v751, 0.0
    %894 = vadd.xlane.f32.xlu0 %v893
    %v895 = vpop.xlane.xlu0 %894
    %v896 = vsel %vm134, %v752, 0.0
    %897 = vadd.xlane.f32.xlu0 %v896
    %v898 = vpop.xlane.xlu0 %897
    %v899 = vsel %vm134, %v753, 0.0
    %900 = vadd.xlane.f32.xlu0 %v899
    %v901 = vpop.xlane.xlu0 %900
    %v902 = vsel %vm134, %v754, 0.0
    %903 = vadd.xlane.f32.xlu0 %v902
    %v904 = vpop.xlane.xlu0 %903
    %v905 = vsel %vm134, %v755, 0.0
    %906 = vadd.xlane.f32.xlu0 %v905
    %v907 = vpop.xlane.xlu0 %906
    %v908 = vsel %vm134, %v756, 0.0
    %909 = vadd.xlane.f32.xlu0 %v908
    %v910 = vpop.xlane.xlu0 %909
    %v911 = vsel %vm134, %v757, 0.0
    %912 = vadd.xlane.f32.xlu0 %v911
    %v913 = vpop.xlane.xlu0 %912
    %v914 = vsel %vm134, %v758, 0.0
    %915 = vadd.xlane.f32.xlu0 %v914
    %v916 = vpop.xlane.xlu0 %915
    %v917 = vsel %vm134, %v759, 0.0
    %918 = vadd.xlane.f32.xlu0 %v917
    %v919 = vpop.xlane.xlu0 %918
    %v920 = vsel %vm134, %v760, 0.0
    %921 = vadd.xlane.f32.xlu0 %v920
    %v922 = vpop.xlane.xlu0 %921
    %v923 = vsel %vm134, %v761, 0.0
    %924 = vadd.xlane.f32.xlu0 %v923
    %v925 = vpop.xlane.xlu0 %924
    %v926 = vsel %vm134, %v762, 0.0
    %927 = vadd.xlane.f32.xlu0 %v926
    %v928 = vpop.xlane.xlu0 %927
    %v929 = vsel %vm134, %v763, 0.0
    %930 = vadd.xlane.f32.xlu0 %v929
    %v931 = vpop.xlane.xlu0 %930
    %v932 = vsel %vm134, %v764, 0.0
    %933 = vadd.xlane.f32.xlu0 %v932
    %v934 = vpop.xlane.xlu0 %933
    %v935 = vsel %vm134, %v765, 0.0
    %936 = vadd.xlane.f32.xlu0 %v935
    %v937 = vpop.xlane.xlu0 %936
    %v938 = vsel %vm134, %v766, 0.0
    %939 = vadd.xlane.f32.xlu0 %v938
    %v940 = vpop.xlane.xlu0 %939
    %v941 = vsel %vm134, %v767, 0.0
    %942 = vadd.xlane.f32.xlu0 %v941
    %v943 = vpop.xlane.xlu0 %942
    %v944 = vsel %vm134, %v768, 0.0
    %945 = vadd.xlane.f32.xlu0 %v944
    %v946 = vpop.xlane.xlu0 %945
    %v947 = vsel %vm134, %v769, 0.0
    %948 = vadd.xlane.f32.xlu0 %v947
    %v949 = vpop.xlane.xlu0 %948
    %v950 = vsel %vm134, %v770, 0.0
    %951 = vadd.xlane.f32.xlu0 %v950
    %v952 = vpop.xlane.xlu0 %951
    %v953 = vsel %vm134, %v771, 0.0
    %954 = vadd.xlane.f32.xlu0 %v953
    %v955 = vpop.xlane.xlu0 %954
    %v956 = vsel %vm134, %v772, 0.0
    %957 = vadd.xlane.f32.xlu0 %v956
    %v958 = vpop.xlane.xlu0 %957
    %v959 = vsel %vm134, %v773, 0.0
    %960 = vadd.xlane.f32.xlu0 %v959
    %v961 = vpop.xlane.xlu0 %960
    %v962 = vsel %vm134, %v774, 0.0
    %963 = vadd.xlane.f32.xlu0 %v962
    %v964 = vpop.xlane.xlu0 %963
    %v965 = vsel %vm134, %v775, 0.0
    %966 = vadd.xlane.f32.xlu0 %v965
    %v967 = vpop.xlane.xlu0 %966
    %v968 = vrcp.pop 32.0
    %v969 = vmul.f32 %v778, %v968
    %v970 = vmul.f32 %v781, %v968
    %v971 = vmul.f32 %v784, %v968
    %v972 = vmul.f32 %v787, %v968
    %v973 = vmul.f32 %v790, %v968
    %v974 = vmul.f32 %v793, %v968
    %v975 = vmul.f32 %v796, %v968
    %v976 = vmul.f32 %v799, %v968
    %v977 = vmul.f32 %v802, %v968
    %v978 = vmul.f32 %v805, %v968
    %v979 = vmul.f32 %v808, %v968
    %v980 = vmul.f32 %v811, %v968
    %v981 = vmul.f32 %v814, %v968
    %v982 = vmul.f32 %v817, %v968
    %v983 = vmul.f32 %v820, %v968
    %v984 = vmul.f32 %v823, %v968
    %v985 = vmul.f32 %v826, %v968
    %v986 = vmul.f32 %v829, %v968
    %v987 = vmul.f32 %v832, %v968
    %v988 = vmul.f32 %v835, %v968
    %v989 = vmul.f32 %v838, %v968
    %v990 = vmul.f32 %v841, %v968
    %v991 = vmul.f32 %v844, %v968
    %v992 = vmul.f32 %v847, %v968
    %v993 = vmul.f32 %v850, %v968
    %v994 = vmul.f32 %v853, %v968
    %v995 = vmul.f32 %v856, %v968
    %v996 = vmul.f32 %v859, %v968
    %v997 = vmul.f32 %v862, %v968
    %v998 = vmul.f32 %v865, %v968
    %v999 = vmul.f32 %v868, %v968
    %v1000 = vmul.f32 %v871, %v968
    %v1001 = vmul.f32 %v874, %v968
    %v1002 = vmul.f32 %v877, %v968
    %v1003 = vmul.f32 %v880, %v968
    %v1004 = vmul.f32 %v883, %v968
    %v1005 = vmul.f32 %v886, %v968
    %v1006 = vmul.f32 %v889, %v968
    %v1007 = vmul.f32 %v892, %v968
    %v1008 = vmul.f32 %v895, %v968
    %v1009 = vmul.f32 %v898, %v968
    %v1010 = vmul.f32 %v901, %v968
    %v1011 = vmul.f32 %v904, %v968
    %v1012 = vmul.f32 %v907, %v968
    %v1013 = vmul.f32 %v910, %v968
    %v1014 = vmul.f32 %v913, %v968
    %v1015 = vmul.f32 %v916, %v968
    %v1016 = vmul.f32 %v919, %v968
    %v1017 = vmul.f32 %v922, %v968
    %v1018 = vmul.f32 %v925, %v968
    %v1019 = vmul.f32 %v928, %v968
    %v1020 = vmul.f32 %v931, %v968
    %v1021 = vmul.f32 %v934, %v968
    %v1022 = vmul.f32 %v937, %v968
    %v1023 = vmul.f32 %v940, %v968
    %v1024 = vmul.f32 %v943, %v968
    %v1025 = vmul.f32 %v946, %v968
    %v1026 = vmul.f32 %v949, %v968
    %v1027 = vmul.f32 %v952, %v968
    %v1028 = vmul.f32 %v955, %v968
    %v1029 = vmul.f32 %v958, %v968
    %v1030 = vmul.f32 %v961, %v968
    %v1031 = vmul.f32 %v964, %v968
    %v1032 = vmul.f32 %v967, %v968
    %v1033 = vsel %vm134, %v712, -inf
    %1034 = vmax.xlane.f32.xlu0 %v1033
    %v1035 = vpop.xlane.xlu0 %1034
    %v1036 = vsel %vm134, %v713, -inf
    %1037 = vmax.xlane.f32.xlu0 %v1036
    %v1038 = vpop.xlane.xlu0 %1037
    %v1039 = vsel %vm134, %v714, -inf
    %1040 = vmax.xlane.f32.xlu0 %v1039
    %v1041 = vpop.xlane.xlu0 %1040
    %v1042 = vsel %vm134, %v715, -inf
    %1043 = vmax.xlane.f32.xlu0 %v1042
    %v1044 = vpop.xlane.xlu0 %1043
    %v1045 = vsel %vm134, %v716, -inf
    %1046 = vmax.xlane.f32.xlu0 %v1045
    %v1047 = vpop.xlane.xlu0 %1046
    %v1048 = vsel %vm134, %v717, -inf
    %1049 = vmax.xlane.f32.xlu0 %v1048
    %v1050 = vpop.xlane.xlu0 %1049
    %v1051 = vsel %vm134, %v718, -inf
    %1052 = vmax.xlane.f32.xlu0 %v1051
    %v1053 = vpop.xlane.xlu0 %1052
    %v1054 = vsel %vm134, %v719, -inf
    %1055 = vmax.xlane.f32.xlu0 %v1054
    %v1056 = vpop.xlane.xlu0 %1055
    %v1057 = vsel %vm134, %v720, -inf
    %1058 = vmax.xlane.f32.xlu0 %v1057
    %v1059 = vpop.xlane.xlu0 %1058
    %v1060 = vsel %vm134, %v721, -inf
    %1061 = vmax.xlane.f32.xlu0 %v1060
    %v1062 = vpop.xlane.xlu0 %1061
    %v1063 = vsel %vm134, %v722, -inf
    %1064 = vmax.xlane.f32.xlu0 %v1063
    %v1065 = vpop.xlane.xlu0 %1064
    %v1066 = vsel %vm134, %v723, -inf
    %1067 = vmax.xlane.f32.xlu0 %v1066
    %v1068 = vpop.xlane.xlu0 %1067
    %v1069 = vsel %vm134, %v724, -inf
    %1070 = vmax.xlane.f32.xlu0 %v1069
    %v1071 = vpop.xlane.xlu0 %1070
    %v1072 = vsel %vm134, %v725, -inf
    %1073 = vmax.xlane.f32.xlu0 %v1072
    %v1074 = vpop.xlane.xlu0 %1073
    %v1075 = vsel %vm134, %v726, -inf
    %1076 = vmax.xlane.f32.xlu0 %v1075
    %v1077 = vpop.xlane.xlu0 %1076
    %v1078 = vsel %vm134, %v727, -inf
    %1079 = vmax.xlane.f32.xlu0 %v1078
    %v1080 = vpop.xlane.xlu0 %1079
    %v1081 = vsel %vm134, %v728, -inf
    %1082 = vmax.xlane.f32.xlu0 %v1081
    %v1083 = vpop.xlane.xlu0 %1082
    %v1084 = vsel %vm134, %v729, -inf
    %1085 = vmax.xlane.f32.xlu0 %v1084
    %v1086 = vpop.xlane.xlu0 %1085
    %v1087 = vsel %vm134, %v730, -inf
    %1088 = vmax.xlane.f32.xlu0 %v1087
    %v1089 = vpop.xlane.xlu0 %1088
    %v1090 = vsel %vm134, %v731, -inf
    %1091 = vmax.xlane.f32.xlu0 %v1090
    %v1092 = vpop.xlane.xlu0 %1091
    %v1093 = vsel %vm134, %v732, -inf
    %1094 = vmax.xlane.f32.xlu0 %v1093
    %v1095 = vpop.xlane.xlu0 %1094
    %v1096 = vsel %vm134, %v733, -inf
    %1097 = vmax.xlane.f32.xlu0 %v1096
    %v1098 = vpop.xlane.xlu0 %1097
    %v1099 = vsel %vm134, %v734, -inf
    %1100 = vmax.xlane.f32.xlu0 %v1099
    %v1101 = vpop.xlane.xlu0 %1100
    %v1102 = vsel %vm134, %v735, -inf
    %1103 = vmax.xlane.f32.xlu0 %v1102
    %v1104 = vpop.xlane.xlu0 %1103
    %v1105 = vsel %vm134, %v736, -inf
    %1106 = vmax.xlane.f32.xlu0 %v1105
    %v1107 = vpop.xlane.xlu0 %1106
    %v1108 = vsel %vm134, %v737, -inf
    %1109 = vmax.xlane.f32.xlu0 %v1108
    %v1110 = vpop.xlane.xlu0 %1109
    %v1111 = vsel %vm134, %v738, -inf
    %1112 = vmax.xlane.f32.xlu0 %v1111
    %v1113 = vpop.xlane.xlu0 %1112
    %v1114 = vsel %vm134, %v739, -inf
    %1115 = vmax.xlane.f32.xlu0 %v1114
    %v1116 = vpop.xlane.xlu0 %1115
    %v1117 = vsel %vm134, %v740, -inf
    %1118 = vmax.xlane.f32.xlu0 %v1117
    %v1119 = vpop.xlane.xlu0 %1118
    %v1120 = vsel %vm134, %v741, -inf
    %1121 = vmax.xlane.f32.xlu0 %v1120
    %v1122 = vpop.xlane.xlu0 %1121
    %v1123 = vsel %vm134, %v742, -inf
    %1124 = vmax.xlane.f32.xlu0 %v1123
    %v1125 = vpop.xlane.xlu0 %1124
    %v1126 = vsel %vm134, %v743, -inf
    %1127 = vmax.xlane.f32.xlu0 %v1126
    %v1128 = vpop.xlane.xlu0 %1127
    %v1129 = vsel %vm134, %v744, -inf
    %1130 = vmax.xlane.f32.xlu0 %v1129
    %v1131 = vpop.xlane.xlu0 %1130
    %v1132 = vsel %vm134, %v745, -inf
    %1133 = vmax.xlane.f32.xlu0 %v1132
    %v1134 = vpop.xlane.xlu0 %1133
    %v1135 = vsel %vm134, %v746, -inf
    %1136 = vmax.xlane.f32.xlu0 %v1135
    %v1137 = vpop.xlane.xlu0 %1136
    %v1138 = vsel %vm134, %v747, -inf
    %1139 = vmax.xlane.f32.xlu0 %v1138
    %v1140 = vpop.xlane.xlu0 %1139
    %v1141 = vsel %vm134, %v748, -inf
    %1142 = vmax.xlane.f32.xlu0 %v1141
    %v1143 = vpop.xlane.xlu0 %1142
    %v1144 = vsel %vm134, %v749, -inf
    %1145 = vmax.xlane.f32.xlu0 %v1144
    %v1146 = vpop.xlane.xlu0 %1145
    %v1147 = vsel %vm134, %v750, -inf
    %1148 = vmax.xlane.f32.xlu0 %v1147
    %v1149 = vpop.xlane.xlu0 %1148
    %v1150 = vsel %vm134, %v751, -inf
    %1151 = vmax.xlane.f32.xlu0 %v1150
    %v1152 = vpop.xlane.xlu0 %1151
    %v1153 = vsel %vm134, %v752, -inf
    %1154 = vmax.xlane.f32.xlu0 %v1153
    %v1155 = vpop.xlane.xlu0 %1154
    %v1156 = vsel %vm134, %v753, -inf
    %1157 = vmax.xlane.f32.xlu0 %v1156
    %v1158 = vpop.xlane.xlu0 %1157
    %v1159 = vsel %vm134, %v754, -inf
    %1160 = vmax.xlane.f32.xlu0 %v1159
    %v1161 = vpop.xlane.xlu0 %1160
    %v1162 = vsel %vm134, %v755, -inf
    %1163 = vmax.xlane.f32.xlu0 %v1162
    %v1164 = vpop.xlane.xlu0 %1163
    %v1165 = vsel %vm134, %v756, -inf
    %1166 = vmax.xlane.f32.xlu0 %v1165
    %v1167 = vpop.xlane.xlu0 %1166
    %v1168 = vsel %vm134, %v757, -inf
    %1169 = vmax.xlane.f32.xlu0 %v1168
    %v1170 = vpop.xlane.xlu0 %1169
    %v1171 = vsel %vm134, %v758, -inf
    %1172 = vmax.xlane.f32.xlu0 %v1171
    %v1173 = vpop.xlane.xlu0 %1172
    %v1174 = vsel %vm134, %v759, -inf
    %1175 = vmax.xlane.f32.xlu0 %v1174
    %v1176 = vpop.xlane.xlu0 %1175
    %v1177 = vsel %vm134, %v760, -inf
    %1178 = vmax.xlane.f32.xlu0 %v1177
    %v1179 = vpop.xlane.xlu0 %1178
    %v1180 = vsel %vm134, %v761, -inf
    %1181 = vmax.xlane.f32.xlu0 %v1180
    %v1182 = vpop.xlane.xlu0 %1181
    %v1183 = vsel %vm134, %v762, -inf
    %1184 = vmax.xlane.f32.xlu0 %v1183
    %v1185 = vpop.xlane.xlu0 %1184
    %v1186 = vsel %vm134, %v763, -inf
    %1187 = vmax.xlane.f32.xlu0 %v1186
    %v1188 = vpop.xlane.xlu0 %1187
    %v1189 = vsel %vm134, %v764, -inf
    %1190 = vmax.xlane.f32.xlu0 %v1189
    %v1191 = vpop.xlane.xlu0 %1190
    %v1192 = vsel %vm134, %v765, -inf
    %1193 = vmax.xlane.f32.xlu0 %v1192
    %v1194 = vpop.xlane.xlu0 %1193
    %v1195 = vsel %vm134, %v766, -inf
    %1196 = vmax.xlane.f32.xlu0 %v1195
    %v1197 = vpop.xlane.xlu0 %1196
    %v1198 = vsel %vm134, %v767, -inf
    %1199 = vmax.xlane.f32.xlu0 %v1198
    %v1200 = vpop.xlane.xlu0 %1199
    %v1201 = vsel %vm134, %v768, -inf
    %1202 = vmax.xlane.f32.xlu0 %v1201
    %v1203 = vpop.xlane.xlu0 %1202
    %v1204 = vsel %vm134, %v769, -inf
    %1205 = vmax.xlane.f32.xlu0 %v1204
    %v1206 = vpop.xlane.xlu0 %1205
    %v1207 = vsel %vm134, %v770, -inf
    %1208 = vmax.xlane.f32.xlu0 %v1207
    %v1209 = vpop.xlane.xlu0 %1208
    %v1210 = vsel %vm134, %v771, -inf
    %1211 = vmax.xlane.f32.xlu0 %v1210
    %v1212 = vpop.xlane.xlu0 %1211
    %v1213 = vsel %vm134, %v772, -inf
    %1214 = vmax.xlane.f32.xlu0 %v1213
    %v1215 = vpop.xlane.xlu0 %1214
    %v1216 = vsel %vm134, %v773, -inf
    %1217 = vmax.xlane.f32.xlu0 %v1216
    %v1218 = vpop.xlane.xlu0 %1217
    %v1219 = vsel %vm134, %v774, -inf
    %1220 = vmax.xlane.f32.xlu0 %v1219
    %v1221 = vpop.xlane.xlu0 %1220
    %v1222 = vsel %vm134, %v775, -inf
    %1223 = vmax.xlane.f32.xlu0 %v1222
    %v1224 = vpop.xlane.xlu0 %1223
    %v1289 = vlaneseq
    %v1290 = vand.u32 %v1289, 127
    %v1291 = vlaneseq
    %v1292 = vshrl.u32 %v1291, 7
    %v1293 = vsub.s32 %v1290, %v1292
    %v1294 = vrot.slane %v969, %v1293
    %v1295 = vadd.s32 %v1290, 4294967288
    %v1296 = vlaneseq
    %v1297 = vshrl.u32 %v1296, 7
    %v1298 = vsub.s32 %v1295, %v1297
    %v1299 = vrot.slane %v970, %v1298
    %vm1300 = vcmask 130112
    %v1301 = vsel %vm1300, %v1299, %v1294
    %v1302 = vadd.s32 %v1290, 4294967280
    %v1303 = vlaneseq
    %v1304 = vshrl.u32 %v1303, 7
    %v1305 = vsub.s32 %v1302, %v1304
    %v1306 = vrot.slane %v971, %v1305
    %vm1307 = vcmask 195712
    %v1308 = vsel %vm1307, %v1306, %v1301
    %v1309 = vadd.s32 %v1290, 4294967272
    %v1310 = vlaneseq
    %v1311 = vshrl.u32 %v1310, 7
    %v1312 = vsub.s32 %v1309, %v1311
    %v1313 = vrot.slane %v972, %v1312
    %vm1314 = vcmask 261312
    %v1315 = vsel %vm1314, %v1313, %v1308
    %v1316 = vadd.s32 %v1290, 4294967264
    %v1317 = vlaneseq
    %v1318 = vshrl.u32 %v1317, 7
    %v1319 = vsub.s32 %v1316, %v1318
    %v1320 = vrot.slane %v973, %v1319
    %vm1321 = vcmask 326912
    %v1322 = vsel %vm1321, %v1320, %v1315
    %v1323 = vadd.s32 %v1290, 4294967256
    %v1324 = vlaneseq
    %v1325 = vshrl.u32 %v1324, 7
    %v1326 = vsub.s32 %v1323, %v1325
    %v1327 = vrot.slane %v974, %v1326
    %vm1328 = vcmask 392512
    %v1329 = vsel %vm1328, %v1327, %v1322
    %v1330 = vadd.s32 %v1290, 4294967248
    %v1331 = vlaneseq
    %v1332 = vshrl.u32 %v1331, 7
    %v1333 = vsub.s32 %v1330, %v1332
    %v1334 = vrot.slane %v975, %v1333
    %vm1335 = vcmask 458112
    %v1336 = vsel %vm1335, %v1334, %v1329
    %v1337 = vadd.s32 %v1290, 4294967240
    %v1338 = vlaneseq
    %v1339 = vshrl.u32 %v1338, 7
    %v1340 = vsub.s32 %v1337, %v1339
    %v1341 = vrot.slane %v976, %v1340
    %vm1342 = vcmask 523712
    %v1343 = vsel %vm1342, %v1341, %v1336
    %v1344 = vadd.s32 %v1290, 4294967232
    %v1345 = vlaneseq
    %v1346 = vshrl.u32 %v1345, 7
    %v1347 = vsub.s32 %v1344, %v1346
    %v1348 = vrot.slane %v977, %v1347
    %vm1349 = vcmask 589312
    %v1350 = vsel %vm1349, %v1348, %v1343
    %v1351 = vadd.s32 %v1290, 4294967224
    %v1352 = vlaneseq
    %v1353 = vshrl.u32 %v1352, 7
    %v1354 = vsub.s32 %v1351, %v1353
    %v1355 = vrot.slane %v978, %v1354
    %vm1356 = vcmask 654912
    %v1357 = vsel %vm1356, %v1355, %v1350
    %v1358 = vadd.s32 %v1290, 4294967216
    %v1359 = vlaneseq
    %v1360 = vshrl.u32 %v1359, 7
    %v1361 = vsub.s32 %v1358, %v1360
    %v1362 = vrot.slane %v979, %v1361
    %vm1363 = vcmask 720512
    %v1364 = vsel %vm1363, %v1362, %v1357
    %v1365 = vadd.s32 %v1290, 4294967208
    %v1366 = vlaneseq
    %v1367 = vshrl.u32 %v1366, 7
    %v1368 = vsub.s32 %v1365, %v1367
    %v1369 = vrot.slane %v980, %v1368
    %vm1370 = vcmask 786112
    %v1371 = vsel %vm1370, %v1369, %v1364
    %v1372 = vadd.s32 %v1290, 4294967200
    %v1373 = vlaneseq
    %v1374 = vshrl.u32 %v1373, 7
    %v1375 = vsub.s32 %v1372, %v1374
    %v1376 = vrot.slane %v981, %v1375
    %vm1377 = vcmask 851712
    %v1378 = vsel %vm1377, %v1376, %v1371
    %v1379 = vadd.s32 %v1290, 4294967192
    %v1380 = vlaneseq
    %v1381 = vshrl.u32 %v1380, 7
    %v1382 = vsub.s32 %v1379, %v1381
    %v1383 = vrot.slane %v982, %v1382
    %vm1384 = vcmask 917312
    %v1385 = vsel %vm1384, %v1383, %v1378
    %v1386 = vadd.s32 %v1290, 4294967184
    %v1387 = vlaneseq
    %v1388 = vshrl.u32 %v1387, 7
    %v1389 = vsub.s32 %v1386, %v1388
    %v1390 = vrot.slane %v983, %v1389
    %vm1391 = vcmask 982912
    %v1392 = vsel %vm1391, %v1390, %v1385
    %v1393 = vadd.s32 %v1290, 4294967176
    %v1394 = vlaneseq
    %v1395 = vshrl.u32 %v1394, 7
    %v1396 = vsub.s32 %v1393, %v1395
    %v1397 = vrot.slane %v984, %v1396
    %vm1398 = vcmask 1048512
    %v1399 = vsel %vm1398, %v1397, %v1392
    %v1400 = vlaneseq
    %v1401 = vshrl.u32 %v1400, 7
    %v1402 = vsub.s32 %v1290, %v1401
    %v1403 = vrot.slane %v985, %v1402
    %v1404 = vlaneseq
    %v1405 = vshrl.u32 %v1404, 7
    %v1406 = vsub.s32 %v1295, %v1405
    %v1407 = vrot.slane %v986, %v1406
    %v1408 = vsel %vm1300, %v1407, %v1403
    %v1409 = vlaneseq
    %v1410 = vshrl.u32 %v1409, 7
    %v1411 = vsub.s32 %v1302, %v1410
    %v1412 = vrot.slane %v987, %v1411
    %v1413 = vsel %vm1307, %v1412, %v1408
    %v1414 = vlaneseq
    %v1415 = vshrl.u32 %v1414, 7
    %v1416 = vsub.s32 %v1309, %v1415
    %v1417 = vrot.slane %v988, %v1416
    %v1418 = vsel %vm1314, %v1417, %v1413
    %v1419 = vlaneseq
    %v1420 = vshrl.u32 %v1419, 7
    %v1421 = vsub.s32 %v1316, %v1420
    %v1422 = vrot.slane %v989, %v1421
    %v1423 = vsel %vm1321, %v1422, %v1418
    %v1424 = vlaneseq
    %v1425 = vshrl.u32 %v1424, 7
    %v1426 = vsub.s32 %v1323, %v1425
    %v1427 = vrot.slane %v990, %v1426
    %v1428 = vsel %vm1328, %v1427, %v1423
    %v1429 = vlaneseq
    %v1430 = vshrl.u32 %v1429, 7
    %v1431 = vsub.s32 %v1330, %v1430
    %v1432 = vrot.slane %v991, %v1431
    %v1433 = vsel %vm1335, %v1432, %v1428
    %v1434 = vlaneseq
    %v1435 = vshrl.u32 %v1434, 7
    %v1436 = vsub.s32 %v1337, %v1435
    %v1437 = vrot.slane %v992, %v1436
    %v1438 = vsel %vm1342, %v1437, %v1433
    %v1439 = vlaneseq
    %v1440 = vshrl.u32 %v1439, 7
    %v1441 = vsub.s32 %v1344, %v1440
    %v1442 = vrot.slane %v993, %v1441
    %v1443 = vsel %vm1349, %v1442, %v1438
    %v1444 = vlaneseq
    %v1445 = vshrl.u32 %v1444, 7
    %v1446 = vsub.s32 %v1351, %v1445
    %v1447 = vrot.slane %v994, %v1446
    %v1448 = vsel %vm1356, %v1447, %v1443
    %v1449 = vlaneseq
    %v1450 = vshrl.u32 %v1449, 7
    %v1451 = vsub.s32 %v1358, %v1450
    %v1452 = vrot.slane %v995, %v1451
    %v1453 = vsel %vm1363, %v1452, %v1448
    %v1454 = vlaneseq
    %v1455 = vshrl.u32 %v1454, 7
    %v1456 = vsub.s32 %v1365, %v1455
    %v1457 = vrot.slane %v996, %v1456
    %v1458 = vsel %vm1370, %v1457, %v1453
    %v1459 = vlaneseq
    %v1460 = vshrl.u32 %v1459, 7
    %v1461 = vsub.s32 %v1372, %v1460
    %v1462 = vrot.slane %v997, %v1461
    %v1463 = vsel %vm1377, %v1462, %v1458
    %v1464 = vlaneseq
    %v1465 = vshrl.u32 %v1464, 7
    %v1466 = vsub.s32 %v1379, %v1465
    %v1467 = vrot.slane %v998, %v1466
    %v1468 = vsel %vm1384, %v1467, %v1463
    %v1469 = vlaneseq
    %v1470 = vshrl.u32 %v1469, 7
    %v1471 = vsub.s32 %v1386, %v1470
    %v1472 = vrot.slane %v999, %v1471
    %v1473 = vsel %vm1391, %v1472, %v1468
    %v1474 = vlaneseq
    %v1475 = vshrl.u32 %v1474, 7
    %v1476 = vsub.s32 %v1393, %v1475
    %v1477 = vrot.slane %v1000, %v1476
    %v1478 = vsel %vm1398, %v1477, %v1473
    %v1479 = vlaneseq
    %v1480 = vshrl.u32 %v1479, 7
    %v1481 = vsub.s32 %v1290, %v1480
    %v1482 = vrot.slane %v1001, %v1481
    %v1483 = vlaneseq
    %v1484 = vshrl.u32 %v1483, 7
    %v1485 = vsub.s32 %v1295, %v1484
    %v1486 = vrot.slane %v1002, %v1485
    %v1487 = vsel %vm1300, %v1486, %v1482
    %v1488 = vlaneseq
    %v1489 = vshrl.u32 %v1488, 7
    %v1490 = vsub.s32 %v1302, %v1489
    %v1491 = vrot.slane %v1003, %v1490
    %v1492 = vsel %vm1307, %v1491, %v1487
    %v1493 = vlaneseq
    %v1494 = vshrl.u32 %v1493, 7
    %v1495 = vsub.s32 %v1309, %v1494
    %v1496 = vrot.slane %v1004, %v1495
    %v1497 = vsel %vm1314, %v1496, %v1492
    %v1498 = vlaneseq
    %v1499 = vshrl.u32 %v1498, 7
    %v1500 = vsub.s32 %v1316, %v1499
    %v1501 = vrot.slane %v1005, %v1500
    %v1502 = vsel %vm1321, %v1501, %v1497
    %v1503 = vlaneseq
    %v1504 = vshrl.u32 %v1503, 7
    %v1505 = vsub.s32 %v1323, %v1504
    %v1506 = vrot.slane %v1006, %v1505
    %v1507 = vsel %vm1328, %v1506, %v1502
    %v1508 = vlaneseq
    %v1509 = vshrl.u32 %v1508, 7
    %v1510 = vsub.s32 %v1330, %v1509
    %v1511 = vrot.slane %v1007, %v1510
    %v1512 = vsel %vm1335, %v1511, %v1507
    %v1513 = vlaneseq
    %v1514 = vshrl.u32 %v1513, 7
    %v1515 = vsub.s32 %v1337, %v1514
    %v1516 = vrot.slane %v1008, %v1515
    %v1517 = vsel %vm1342, %v1516, %v1512
    %v1518 = vlaneseq
    %v1519 = vshrl.u32 %v1518, 7
    %v1520 = vsub.s32 %v1344, %v1519
    %v1521 = vrot.slane %v1009, %v1520
    %v1522 = vsel %vm1349, %v1521, %v1517
    %v1523 = vlaneseq
    %v1524 = vshrl.u32 %v1523, 7
    %v1525 = vsub.s32 %v1351, %v1524
    %v1526 = vrot.slane %v1010, %v1525
    %v1527 = vsel %vm1356, %v1526, %v1522
    %v1528 = vlaneseq
    %v1529 = vshrl.u32 %v1528, 7
    %v1530 = vsub.s32 %v1358, %v1529
    %v1531 = vrot.slane %v1011, %v1530
    %v1532 = vsel %vm1363, %v1531, %v1527
    %v1533 = vlaneseq
    %v1534 = vshrl.u32 %v1533, 7
    %v1535 = vsub.s32 %v1365, %v1534
    %v1536 = vrot.slane %v1012, %v1535
    %v1537 = vsel %vm1370, %v1536, %v1532
    %v1538 = vlaneseq
    %v1539 = vshrl.u32 %v1538, 7
    %v1540 = vsub.s32 %v1372, %v1539
    %v1541 = vrot.slane %v1013, %v1540
    %v1542 = vsel %vm1377, %v1541, %v1537
    %v1543 = vlaneseq
    %v1544 = vshrl.u32 %v1543, 7
    %v1545 = vsub.s32 %v1379, %v1544
    %v1546 = vrot.slane %v1014, %v1545
    %v1547 = vsel %vm1384, %v1546, %v1542
    %v1548 = vlaneseq
    %v1549 = vshrl.u32 %v1548, 7
    %v1550 = vsub.s32 %v1386, %v1549
    %v1551 = vrot.slane %v1015, %v1550
    %v1552 = vsel %vm1391, %v1551, %v1547
    %v1553 = vlaneseq
    %v1554 = vshrl.u32 %v1553, 7
    %v1555 = vsub.s32 %v1393, %v1554
    %v1556 = vrot.slane %v1016, %v1555
    %v1557 = vsel %vm1398, %v1556, %v1552
    %v1558 = vlaneseq
    %v1559 = vshrl.u32 %v1558, 7
    %v1560 = vsub.s32 %v1290, %v1559
    %v1561 = vrot.slane %v1017, %v1560
    %v1562 = vlaneseq
    %v1563 = vshrl.u32 %v1562, 7
    %v1564 = vsub.s32 %v1295, %v1563
    %v1565 = vrot.slane %v1018, %v1564
    %v1566 = vsel %vm1300, %v1565, %v1561
    %v1567 = vlaneseq
    %v1568 = vshrl.u32 %v1567, 7
    %v1569 = vsub.s32 %v1302, %v1568
    %v1570 = vrot.slane %v1019, %v1569
    %v1571 = vsel %vm1307, %v1570, %v1566
    %v1572 = vlaneseq
    %v1573 = vshrl.u32 %v1572, 7
    %v1574 = vsub.s32 %v1309, %v1573
    %v1575 = vrot.slane %v1020, %v1574
    %v1576 = vsel %vm1314, %v1575, %v1571
    %v1577 = vlaneseq
    %v1578 = vshrl.u32 %v1577, 7
    %v1579 = vsub.s32 %v1316, %v1578
    %v1580 = vrot.slane %v1021, %v1579
    %v1581 = vsel %vm1321, %v1580, %v1576
    %v1582 = vlaneseq
    %v1583 = vshrl.u32 %v1582, 7
    %v1584 = vsub.s32 %v1323, %v1583
    %v1585 = vrot.slane %v1022, %v1584
    %v1586 = vsel %vm1328, %v1585, %v1581
    %v1587 = vlaneseq
    %v1588 = vshrl.u32 %v1587, 7
    %v1589 = vsub.s32 %v1330, %v1588
    %v1590 = vrot.slane %v1023, %v1589
    %v1591 = vsel %vm1335, %v1590, %v1586
    %v1592 = vlaneseq
    %v1593 = vshrl.u32 %v1592, 7
    %v1594 = vsub.s32 %v1337, %v1593
    %v1595 = vrot.slane %v1024, %v1594
    %v1596 = vsel %vm1342, %v1595, %v1591
    %v1597 = vlaneseq
    %v1598 = vshrl.u32 %v1597, 7
    %v1599 = vsub.s32 %v1344, %v1598
    %v1600 = vrot.slane %v1025, %v1599
    %v1601 = vsel %vm1349, %v1600, %v1596
    %v1602 = vlaneseq
    %v1603 = vshrl.u32 %v1602, 7
    %v1604 = vsub.s32 %v1351, %v1603
    %v1605 = vrot.slane %v1026, %v1604
    %v1606 = vsel %vm1356, %v1605, %v1601
    %v1607 = vlaneseq
    %v1608 = vshrl.u32 %v1607, 7
    %v1609 = vsub.s32 %v1358, %v1608
    %v1610 = vrot.slane %v1027, %v1609
    %v1611 = vsel %vm1363, %v1610, %v1606
    %v1612 = vlaneseq
    %v1613 = vshrl.u32 %v1612, 7
    %v1614 = vsub.s32 %v1365, %v1613
    %v1615 = vrot.slane %v1028, %v1614
    %v1616 = vsel %vm1370, %v1615, %v1611
    %v1617 = vlaneseq
    %v1618 = vshrl.u32 %v1617, 7
    %v1619 = vsub.s32 %v1372, %v1618
    %v1620 = vrot.slane %v1029, %v1619
    %v1621 = vsel %vm1377, %v1620, %v1616
    %v1622 = vlaneseq
    %v1623 = vshrl.u32 %v1622, 7
    %v1624 = vsub.s32 %v1379, %v1623
    %v1625 = vrot.slane %v1030, %v1624
    %v1626 = vsel %vm1384, %v1625, %v1621
    %v1627 = vlaneseq
    %v1628 = vshrl.u32 %v1627, 7
    %v1629 = vsub.s32 %v1386, %v1628
    %v1630 = vrot.slane %v1031, %v1629
    %v1631 = vsel %vm1391, %v1630, %v1626
    %v1632 = vlaneseq
    %v1633 = vshrl.u32 %v1632, 7
    %v1634 = vsub.s32 %v1393, %v1633
    %v1635 = vrot.slane %v1032, %v1634
    %v1636 = vsel %vm1398, %v1635, %v1631
    %vm1637 = vcmask 1041409
    %v1638 = vsel %vm1637, %v1557, %v1399
    %v1639 = vsel %vm1637, %v1636, %v1478
    %v1706 = vlaneseq
    %v1707 = vshrl.u32 %v1706, 7
    %v1708 = vsub.s32 %v1290, %v1707
    %v1709 = vrot.slane %v1035, %v1708
    %v1710 = vlaneseq
    %v1711 = vshrl.u32 %v1710, 7
    %v1712 = vsub.s32 %v1295, %v1711
    %v1713 = vrot.slane %v1038, %v1712
    %v1714 = vsel %vm1300, %v1713, %v1709
    %v1715 = vlaneseq
    %v1716 = vshrl.u32 %v1715, 7
    %v1717 = vsub.s32 %v1302, %v1716
    %v1718 = vrot.slane %v1041, %v1717
    %v1719 = vsel %vm1307, %v1718, %v1714
    %v1720 = vlaneseq
    %v1721 = vshrl.u32 %v1720, 7
    %v1722 = vsub.s32 %v1309, %v1721
    %v1723 = vrot.slane %v1044, %v1722
    %v1724 = vsel %vm1314, %v1723, %v1719
    %v1725 = vlaneseq
    %v1726 = vshrl.u32 %v1725, 7
    %v1727 = vsub.s32 %v1316, %v1726
    %v1728 = vrot.slane %v1047, %v1727
    %v1729 = vsel %vm1321, %v1728, %v1724
    %v1730 = vlaneseq
    %v1731 = vshrl.u32 %v1730, 7
    %v1732 = vsub.s32 %v1323, %v1731
    %v1733 = vrot.slane %v1050, %v1732
    %v1734 = vsel %vm1328, %v1733, %v1729
    %v1735 = vlaneseq
    %v1736 = vshrl.u32 %v1735, 7
    %v1737 = vsub.s32 %v1330, %v1736
    %v1738 = vrot.slane %v1053, %v1737
    %v1739 = vsel %vm1335, %v1738, %v1734
    %v1740 = vlaneseq
    %v1741 = vshrl.u32 %v1740, 7
    %v1742 = vsub.s32 %v1337, %v1741
    %v1743 = vrot.slane %v1056, %v1742
    %v1744 = vsel %vm1342, %v1743, %v1739
    %v1745 = vlaneseq
    %v1746 = vshrl.u32 %v1745, 7
    %v1747 = vsub.s32 %v1344, %v1746
    %v1748 = vrot.slane %v1059, %v1747
    %v1749 = vsel %vm1349, %v1748, %v1744
    %v1750 = vlaneseq
    %v1751 = vshrl.u32 %v1750, 7
    %v1752 = vsub.s32 %v1351, %v1751
    %v1753 = vrot.slane %v1062, %v1752
    %v1754 = vsel %vm1356, %v1753, %v1749
    %v1755 = vlaneseq
    %v1756 = vshrl.u32 %v1755, 7
    %v1757 = vsub.s32 %v1358, %v1756
    %v1758 = vrot.slane %v1065, %v1757
    %v1759 = vsel %vm1363, %v1758, %v1754
    %v1760 = vlaneseq
    %v1761 = vshrl.u32 %v1760, 7
    %v1762 = vsub.s32 %v1365, %v1761
    %v1763 = vrot.slane %v1068, %v1762
    %v1764 = vsel %vm1370, %v1763, %v1759
    %v1765 = vlaneseq
    %v1766 = vshrl.u32 %v1765, 7
    %v1767 = vsub.s32 %v1372, %v1766
    %v1768 = vrot.slane %v1071, %v1767
    %v1769 = vsel %vm1377, %v1768, %v1764
    %v1770 = vlaneseq
    %v1771 = vshrl.u32 %v1770, 7
    %v1772 = vsub.s32 %v1379, %v1771
    %v1773 = vrot.slane %v1074, %v1772
    %v1774 = vsel %vm1384, %v1773, %v1769
    %v1775 = vlaneseq
    %v1776 = vshrl.u32 %v1775, 7
    %v1777 = vsub.s32 %v1386, %v1776
    %v1778 = vrot.slane %v1077, %v1777
    %v1779 = vsel %vm1391, %v1778, %v1774
    %v1780 = vlaneseq
    %v1781 = vshrl.u32 %v1780, 7
    %v1782 = vsub.s32 %v1393, %v1781
    %v1783 = vrot.slane %v1080, %v1782
    %v1784 = vsel %vm1398, %v1783, %v1779
    %v1785 = vlaneseq
    %v1786 = vshrl.u32 %v1785, 7
    %v1787 = vsub.s32 %v1290, %v1786
    %v1788 = vrot.slane %v1083, %v1787
    %v1789 = vlaneseq
    %v1790 = vshrl.u32 %v1789, 7
    %v1791 = vsub.s32 %v1295, %v1790
    %v1792 = vrot.slane %v1086, %v1791
    %v1793 = vsel %vm1300, %v1792, %v1788
    %v1794 = vlaneseq
    %v1795 = vshrl.u32 %v1794, 7
    %v1796 = vsub.s32 %v1302, %v1795
    %v1797 = vrot.slane %v1089, %v1796
    %v1798 = vsel %vm1307, %v1797, %v1793
    %v1799 = vlaneseq
    %v1800 = vshrl.u32 %v1799, 7
    %v1801 = vsub.s32 %v1309, %v1800
    %v1802 = vrot.slane %v1092, %v1801
    %v1803 = vsel %vm1314, %v1802, %v1798
    %v1804 = vlaneseq
    %v1805 = vshrl.u32 %v1804, 7
    %v1806 = vsub.s32 %v1316, %v1805
    %v1807 = vrot.slane %v1095, %v1806
    %v1808 = vsel %vm1321, %v1807, %v1803
    %v1809 = vlaneseq
    %v1810 = vshrl.u32 %v1809, 7
    %v1811 = vsub.s32 %v1323, %v1810
    %v1812 = vrot.slane %v1098, %v1811
    %v1813 = vsel %vm1328, %v1812, %v1808
    %v1814 = vlaneseq
    %v1815 = vshrl.u32 %v1814, 7
    %v1816 = vsub.s32 %v1330, %v1815
    %v1817 = vrot.slane %v1101, %v1816
    %v1818 = vsel %vm1335, %v1817, %v1813
    %v1819 = vlaneseq
    %v1820 = vshrl.u32 %v1819, 7
    %v1821 = vsub.s32 %v1337, %v1820
    %v1822 = vrot.slane %v1104, %v1821
    %v1823 = vsel %vm1342, %v1822, %v1818
    %v1824 = vlaneseq
    %v1825 = vshrl.u32 %v1824, 7
    %v1826 = vsub.s32 %v1344, %v1825
    %v1827 = vrot.slane %v1107, %v1826
    %v1828 = vsel %vm1349, %v1827, %v1823
    %v1829 = vlaneseq
    %v1830 = vshrl.u32 %v1829, 7
    %v1831 = vsub.s32 %v1351, %v1830
    %v1832 = vrot.slane %v1110, %v1831
    %v1833 = vsel %vm1356, %v1832, %v1828
    %v1834 = vlaneseq
    %v1835 = vshrl.u32 %v1834, 7
    %v1836 = vsub.s32 %v1358, %v1835
    %v1837 = vrot.slane %v1113, %v1836
    %v1838 = vsel %vm1363, %v1837, %v1833
    %v1839 = vlaneseq
    %v1840 = vshrl.u32 %v1839, 7
    %v1841 = vsub.s32 %v1365, %v1840
    %v1842 = vrot.slane %v1116, %v1841
    %v1843 = vsel %vm1370, %v1842, %v1838
    %v1844 = vlaneseq
    %v1845 = vshrl.u32 %v1844, 7
    %v1846 = vsub.s32 %v1372, %v1845
    %v1847 = vrot.slane %v1119, %v1846
    %v1848 = vsel %vm1377, %v1847, %v1843
    %v1849 = vlaneseq
    %v1850 = vshrl.u32 %v1849, 7
    %v1851 = vsub.s32 %v1379, %v1850
    %v1852 = vrot.slane %v1122, %v1851
    %v1853 = vsel %vm1384, %v1852, %v1848
    %v1854 = vlaneseq
    %v1855 = vshrl.u32 %v1854, 7
    %v1856 = vsub.s32 %v1386, %v1855
    %v1857 = vrot.slane %v1125, %v1856
    %v1858 = vsel %vm1391, %v1857, %v1853
    %v1859 = vlaneseq
    %v1860 = vshrl.u32 %v1859, 7
    %v1861 = vsub.s32 %v1393, %v1860
    %v1862 = vrot.slane %v1128, %v1861
    %v1863 = vsel %vm1398, %v1862, %v1858
    %v1864 = vlaneseq
    %v1865 = vshrl.u32 %v1864, 7
    %v1866 = vsub.s32 %v1290, %v1865
    %v1867 = vrot.slane %v1131, %v1866
    %v1868 = vlaneseq
    %v1869 = vshrl.u32 %v1868, 7
    %v1870 = vsub.s32 %v1295, %v1869
    %v1871 = vrot.slane %v1134, %v1870
    %v1872 = vsel %vm1300, %v1871, %v1867
    %v1873 = vlaneseq
    %v1874 = vshrl.u32 %v1873, 7
    %v1875 = vsub.s32 %v1302, %v1874
    %v1876 = vrot.slane %v1137, %v1875
    %v1877 = vsel %vm1307, %v1876, %v1872
    %v1878 = vlaneseq
    %v1879 = vshrl.u32 %v1878, 7
    %v1880 = vsub.s32 %v1309, %v1879
    %v1881 = vrot.slane %v1140, %v1880
    %v1882 = vsel %vm1314, %v1881, %v1877
    %v1883 = vlaneseq
    %v1884 = vshrl.u32 %v1883, 7
    %v1885 = vsub.s32 %v1316, %v1884
    %v1886 = vrot.slane %v1143, %v1885
    %v1887 = vsel %vm1321, %v1886, %v1882
    %v1888 = vlaneseq
    %v1889 = vshrl.u32 %v1888, 7
    %v1890 = vsub.s32 %v1323, %v1889
    %v1891 = vrot.slane %v1146, %v1890
    %v1892 = vsel %vm1328, %v1891, %v1887
    %v1893 = vlaneseq
    %v1894 = vshrl.u32 %v1893, 7
    %v1895 = vsub.s32 %v1330, %v1894
    %v1896 = vrot.slane %v1149, %v1895
    %v1897 = vsel %vm1335, %v1896, %v1892
    %v1898 = vlaneseq
    %v1899 = vshrl.u32 %v1898, 7
    %v1900 = vsub.s32 %v1337, %v1899
    %v1901 = vrot.slane %v1152, %v1900
    %v1902 = vsel %vm1342, %v1901, %v1897
    %v1903 = vlaneseq
    %v1904 = vshrl.u32 %v1903, 7
    %v1905 = vsub.s32 %v1344, %v1904
    %v1906 = vrot.slane %v1155, %v1905
    %v1907 = vsel %vm1349, %v1906, %v1902
    %v1908 = vlaneseq
    %v1909 = vshrl.u32 %v1908, 7
    %v1910 = vsub.s32 %v1351, %v1909
    %v1911 = vrot.slane %v1158, %v1910
    %v1912 = vsel %vm1356, %v1911, %v1907
    %v1913 = vlaneseq
    %v1914 = vshrl.u32 %v1913, 7
    %v1915 = vsub.s32 %v1358, %v1914
    %v1916 = vrot.slane %v1161, %v1915
    %v1917 = vsel %vm1363, %v1916, %v1912
    %v1918 = vlaneseq
    %v1919 = vshrl.u32 %v1918, 7
    %v1920 = vsub.s32 %v1365, %v1919
    %v1921 = vrot.slane %v1164, %v1920
    %v1922 = vsel %vm1370, %v1921, %v1917
    %v1923 = vlaneseq
    %v1924 = vshrl.u32 %v1923, 7
    %v1925 = vsub.s32 %v1372, %v1924
    %v1926 = vrot.slane %v1167, %v1925
    %v1927 = vsel %vm1377, %v1926, %v1922
    %v1928 = vlaneseq
    %v1929 = vshrl.u32 %v1928, 7
    %v1930 = vsub.s32 %v1379, %v1929
    %v1931 = vrot.slane %v1170, %v1930
    %v1932 = vsel %vm1384, %v1931, %v1927
    %v1933 = vlaneseq
    %v1934 = vshrl.u32 %v1933, 7
    %v1935 = vsub.s32 %v1386, %v1934
    %v1936 = vrot.slane %v1173, %v1935
    %v1937 = vsel %vm1391, %v1936, %v1932
    %v1938 = vlaneseq
    %v1939 = vshrl.u32 %v1938, 7
    %v1940 = vsub.s32 %v1393, %v1939
    %v1941 = vrot.slane %v1176, %v1940
    %v1942 = vsel %vm1398, %v1941, %v1937
    %v1943 = vlaneseq
    %v1944 = vshrl.u32 %v1943, 7
    %v1945 = vsub.s32 %v1290, %v1944
    %v1946 = vrot.slane %v1179, %v1945
    %v1947 = vlaneseq
    %v1948 = vshrl.u32 %v1947, 7
    %v1949 = vsub.s32 %v1295, %v1948
    %v1950 = vrot.slane %v1182, %v1949
    %v1951 = vsel %vm1300, %v1950, %v1946
    %v1952 = vlaneseq
    %v1953 = vshrl.u32 %v1952, 7
    %v1954 = vsub.s32 %v1302, %v1953
    %v1955 = vrot.slane %v1185, %v1954
    %v1956 = vsel %vm1307, %v1955, %v1951
    %v1957 = vlaneseq
    %v1958 = vshrl.u32 %v1957, 7
    %v1959 = vsub.s32 %v1309, %v1958
    %v1960 = vrot.slane %v1188, %v1959
    %v1961 = vsel %vm1314, %v1960, %v1956
    %v1962 = vlaneseq
    %v1963 = vshrl.u32 %v1962, 7
    %v1964 = vsub.s32 %v1316, %v1963
    %v1965 = vrot.slane %v1191, %v1964
    %v1966 = vsel %vm1321, %v1965, %v1961
    %v1967 = vlaneseq
    %v1968 = vshrl.u32 %v1967, 7
    %v1969 = vsub.s32 %v1323, %v1968
    %v1970 = vrot.slane %v1194, %v1969
    %v1971 = vsel %vm1328, %v1970, %v1966
    %v1972 = vlaneseq
    %v1973 = vshrl.u32 %v1972, 7
    %v1974 = vsub.s32 %v1330, %v1973
    %v1975 = vrot.slane %v1197, %v1974
    %v1976 = vsel %vm1335, %v1975, %v1971
    %v1977 = vlaneseq
    %v1978 = vshrl.u32 %v1977, 7
    %v1979 = vsub.s32 %v1337, %v1978
    %v1980 = vrot.slane %v1200, %v1979
    %v1981 = vsel %vm1342, %v1980, %v1976
    %v1982 = vlaneseq
    %v1983 = vshrl.u32 %v1982, 7
    %v1984 = vsub.s32 %v1344, %v1983
    %v1985 = vrot.slane %v1203, %v1984
    %v1986 = vsel %vm1349, %v1985, %v1981
    %v1987 = vlaneseq
    %v1988 = vshrl.u32 %v1987, 7
    %v1989 = vsub.s32 %v1351, %v1988
    %v1990 = vrot.slane %v1206, %v1989
    %v1991 = vsel %vm1356, %v1990, %v1986
    %v1992 = vlaneseq
    %v1993 = vshrl.u32 %v1992, 7
    %v1994 = vsub.s32 %v1358, %v1993
    %v1995 = vrot.slane %v1209, %v1994
    %v1996 = vsel %vm1363, %v1995, %v1991
    %v1997 = vlaneseq
    %v1998 = vshrl.u32 %v1997, 7
    %v1999 = vsub.s32 %v1365, %v1998
    %v2000 = vrot.slane %v1212, %v1999
    %v2001 = vsel %vm1370, %v2000, %v1996
    %v2002 = vlaneseq
    %v2003 = vshrl.u32 %v2002, 7
    %v2004 = vsub.s32 %v1372, %v2003
    %v2005 = vrot.slane %v1215, %v2004
    %v2006 = vsel %vm1377, %v2005, %v2001
    %v2007 = vlaneseq
    %v2008 = vshrl.u32 %v2007, 7
    %v2009 = vsub.s32 %v1379, %v2008
    %v2010 = vrot.slane %v1218, %v2009
    %v2011 = vsel %vm1384, %v2010, %v2006
    %v2012 = vlaneseq
    %v2013 = vshrl.u32 %v2012, 7
    %v2014 = vsub.s32 %v1386, %v2013
    %v2015 = vrot.slane %v1221, %v2014
    %v2016 = vsel %vm1391, %v2015, %v2011
    %v2017 = vlaneseq
    %v2018 = vshrl.u32 %v2017, 7
    %v2019 = vsub.s32 %v1393, %v2018
    %v2020 = vrot.slane %v1224, %v2019
    %v2021 = vsel %vm1398, %v2020, %v2016
    %v2022 = vsel %vm1637, %v1942, %v1784
    %v2023 = vsel %vm1637, %v2021, %v1863
    %v2026 = vld [vmem:[%s4] sm:$0xff]
    %v2027 = vld [vmem:[%s4 + $0x8] sm:$0xff]
    %v2028 = vld [vmem:[%s4 + $0x10] sm:$0xff]
    %v2029 = vld [vmem:[%s4 + $0x18] sm:$0xff]
    %v2030 = vld [vmem:[%s4 + $0x20] sm:$0xff]
    %v2031 = vld [vmem:[%s4 + $0x28] sm:$0xff]
    %v2032 = vld [vmem:[%s4 + $0x30] sm:$0xff]
    %v2033 = vld [vmem:[%s4 + $0x38] sm:$0xff]
    %v2034 = vld [vmem:[%s4 + $0x40] sm:$0xff]
    %v2035 = vld [vmem:[%s4 + $0x48] sm:$0xff]
    %v2036 = vld [vmem:[%s4 + $0x50] sm:$0xff]
    %v2037 = vld [vmem:[%s4 + $0x58] sm:$0xff]
    %v2038 = vld [vmem:[%s4 + $0x60] sm:$0xff]
    %v2039 = vld [vmem:[%s4 + $0x68] sm:$0xff]
    %v2040 = vld [vmem:[%s4 + $0x70] sm:$0xff]
    %v2041 = vld [vmem:[%s4 + $0x78] sm:$0xff]
    %v2042 = vld [vmem:[%s4 + $0x80] sm:$0xff]
    %v2043 = vld [vmem:[%s4 + $0x88] sm:$0xff]
    %v2044 = vld [vmem:[%s4 + $0x90] sm:$0xff]
    %v2045 = vld [vmem:[%s4 + $0x98] sm:$0xff]
    %v2046 = vld [vmem:[%s4 + $0xa0] sm:$0xff]
    %v2047 = vld [vmem:[%s4 + $0xa8] sm:$0xff]
    %v2048 = vld [vmem:[%s4 + $0xb0] sm:$0xff]
    %v2049 = vld [vmem:[%s4 + $0xb8] sm:$0xff]
    %v2050 = vld [vmem:[%s4 + $0xc0] sm:$0xff]
    %v2051 = vld [vmem:[%s4 + $0xc8] sm:$0xff]
    %v2052 = vld [vmem:[%s4 + $0xd0] sm:$0xff]
    %v2053 = vld [vmem:[%s4 + $0xd8] sm:$0xff]
    %v2054 = vld [vmem:[%s4 + $0xe0] sm:$0xff]
    %v2055 = vld [vmem:[%s4 + $0xe8] sm:$0xff]
    %v2056 = vld [vmem:[%s4 + $0xf0] sm:$0xff]
    %v2057 = vld [vmem:[%s4 + $0xf8] sm:$0xff]
    %v2058 = vld [vmem:[%s4 + $0x100] sm:$0xff]
    %v2059 = vld [vmem:[%s4 + $0x108] sm:$0xff]
    %v2060 = vld [vmem:[%s4 + $0x110] sm:$0xff]
    %v2061 = vld [vmem:[%s4 + $0x118] sm:$0xff]
    %v2062 = vld [vmem:[%s4 + $0x120] sm:$0xff]
    %v2063 = vld [vmem:[%s4 + $0x128] sm:$0xff]
    %v2064 = vld [vmem:[%s4 + $0x130] sm:$0xff]
    %v2065 = vld [vmem:[%s4 + $0x138] sm:$0xff]
    %v2066 = vld [vmem:[%s4 + $0x140] sm:$0xff]
    %v2067 = vld [vmem:[%s4 + $0x148] sm:$0xff]
    %v2068 = vld [vmem:[%s4 + $0x150] sm:$0xff]
    %v2069 = vld [vmem:[%s4 + $0x158] sm:$0xff]
    %v2070 = vld [vmem:[%s4 + $0x160] sm:$0xff]
    %v2071 = vld [vmem:[%s4 + $0x168] sm:$0xff]
    %v2072 = vld [vmem:[%s4 + $0x170] sm:$0xff]
    %v2073 = vld [vmem:[%s4 + $0x178] sm:$0xff]
    %v2074 = vld [vmem:[%s4 + $0x180] sm:$0xff]
    %v2075 = vld [vmem:[%s4 + $0x188] sm:$0xff]
    %v2076 = vld [vmem:[%s4 + $0x190] sm:$0xff]
    %v2077 = vld [vmem:[%s4 + $0x198] sm:$0xff]
    %v2078 = vld [vmem:[%s4 + $0x1a0] sm:$0xff]
    %v2079 = vld [vmem:[%s4 + $0x1a8] sm:$0xff]
    %v2080 = vld [vmem:[%s4 + $0x1b0] sm:$0xff]
    %v2081 = vld [vmem:[%s4 + $0x1b8] sm:$0xff]
    %v2082 = vld [vmem:[%s4 + $0x1c0] sm:$0xff]
    %v2083 = vld [vmem:[%s4 + $0x1c8] sm:$0xff]
    %v2084 = vld [vmem:[%s4 + $0x1d0] sm:$0xff]
    %v2085 = vld [vmem:[%s4 + $0x1d8] sm:$0xff]
    %v2086 = vld [vmem:[%s4 + $0x1e0] sm:$0xff]
    %v2087 = vld [vmem:[%s4 + $0x1e8] sm:$0xff]
    %v2088 = vld [vmem:[%s4 + $0x1f0] sm:$0xff]
    %v2089 = vld [vmem:[%s4 + $0x1f8] sm:$0xff]
    %v2090 = vld [vmem:[%s4 + $0x200] sm:$0xff]
    %v2091 = vld [vmem:[%s4 + $0x208] sm:$0xff]
    %v2092 = vld [vmem:[%s4 + $0x210] sm:$0xff]
    %v2093 = vld [vmem:[%s4 + $0x218] sm:$0xff]
    %v2094 = vld [vmem:[%s4 + $0x220] sm:$0xff]
    %v2095 = vld [vmem:[%s4 + $0x228] sm:$0xff]
    %v2096 = vld [vmem:[%s4 + $0x230] sm:$0xff]
    %v2097 = vld [vmem:[%s4 + $0x238] sm:$0xff]
    %v2098 = vld [vmem:[%s4 + $0x240] sm:$0xff]
    %v2099 = vld [vmem:[%s4 + $0x248] sm:$0xff]
    %v2100 = vld [vmem:[%s4 + $0x250] sm:$0xff]
    %v2101 = vld [vmem:[%s4 + $0x258] sm:$0xff]
    %v2102 = vld [vmem:[%s4 + $0x260] sm:$0xff]
    %v2103 = vld [vmem:[%s4 + $0x268] sm:$0xff]
    %v2104 = vld [vmem:[%s4 + $0x270] sm:$0xff]
    %v2105 = vld [vmem:[%s4 + $0x278] sm:$0xff]
    %v2106 = vld [vmem:[%s4 + $0x280] sm:$0xff]
    %v2107 = vld [vmem:[%s4 + $0x288] sm:$0xff]
    %v2108 = vld [vmem:[%s4 + $0x290] sm:$0xff]
    %v2109 = vld [vmem:[%s4 + $0x298] sm:$0xff]
    %v2110 = vld [vmem:[%s4 + $0x2a0] sm:$0xff]
    %v2111 = vld [vmem:[%s4 + $0x2a8] sm:$0xff]
    %v2112 = vld [vmem:[%s4 + $0x2b0] sm:$0xff]
    %v2113 = vld [vmem:[%s4 + $0x2b8] sm:$0xff]
    %v2114 = vld [vmem:[%s4 + $0x2c0] sm:$0xff]
    %v2115 = vld [vmem:[%s4 + $0x2c8] sm:$0xff]
    %v2116 = vld [vmem:[%s4 + $0x2d0] sm:$0xff]
    %v2117 = vld [vmem:[%s4 + $0x2d8] sm:$0xff]
    %v2118 = vld [vmem:[%s4 + $0x2e0] sm:$0xff]
    %v2119 = vld [vmem:[%s4 + $0x2e8] sm:$0xff]
    %v2120 = vld [vmem:[%s4 + $0x2f0] sm:$0xff]
    %v2121 = vld [vmem:[%s4 + $0x2f8] sm:$0xff]
    %v2122 = vld [vmem:[%s4 + $0x300] sm:$0xff]
    %v2123 = vld [vmem:[%s4 + $0x308] sm:$0xff]
    %v2124 = vld [vmem:[%s4 + $0x310] sm:$0xff]
    %v2125 = vld [vmem:[%s4 + $0x318] sm:$0xff]
    %v2126 = vld [vmem:[%s4 + $0x320] sm:$0xff]
    %v2127 = vld [vmem:[%s4 + $0x328] sm:$0xff]
    %v2128 = vld [vmem:[%s4 + $0x330] sm:$0xff]
    %v2129 = vld [vmem:[%s4 + $0x338] sm:$0xff]
    %v2130 = vld [vmem:[%s4 + $0x340] sm:$0xff]
    %v2131 = vld [vmem:[%s4 + $0x348] sm:$0xff]
    %v2132 = vld [vmem:[%s4 + $0x350] sm:$0xff]
    %v2133 = vld [vmem:[%s4 + $0x358] sm:$0xff]
    %v2134 = vld [vmem:[%s4 + $0x360] sm:$0xff]
    %v2135 = vld [vmem:[%s4 + $0x368] sm:$0xff]
    %v2136 = vld [vmem:[%s4 + $0x370] sm:$0xff]
    %v2137 = vld [vmem:[%s4 + $0x378] sm:$0xff]
    %v2138 = vld [vmem:[%s4 + $0x380] sm:$0xff]
    %v2139 = vld [vmem:[%s4 + $0x388] sm:$0xff]
    %v2140 = vld [vmem:[%s4 + $0x390] sm:$0xff]
    %v2141 = vld [vmem:[%s4 + $0x398] sm:$0xff]
    %v2142 = vld [vmem:[%s4 + $0x3a0] sm:$0xff]
    %v2143 = vld [vmem:[%s4 + $0x3a8] sm:$0xff]
    %v2144 = vld [vmem:[%s4 + $0x3b0] sm:$0xff]
    %v2145 = vld [vmem:[%s4 + $0x3b8] sm:$0xff]
    %v2146 = vld [vmem:[%s4 + $0x3c0] sm:$0xff]
    %v2147 = vld [vmem:[%s4 + $0x3c8] sm:$0xff]
    %v2148 = vld [vmem:[%s4 + $0x3d0] sm:$0xff]
    %v2149 = vld [vmem:[%s4 + $0x3d8] sm:$0xff]
    %v2150 = vld [vmem:[%s4 + $0x3e0] sm:$0xff]
    %v2151 = vld [vmem:[%s4 + $0x3e8] sm:$0xff]
    %v2152 = vld [vmem:[%s4 + $0x3f0] sm:$0xff]
    %v2153 = vld [vmem:[%s4 + $0x3f8] sm:$0xff]
    %2154 = vmatprep.subr.mxu0 %v2057
    %2155 = vmatpush1.msra.mxu0 %v2056
    %2156 = vmatprep.subr.mxu0 %v2055
    %2157 = vmatpush1.msra.mxu0 %v2054
    %2158 = vmatprep.subr.mxu0 %v2053
    %2159 = vmatpush1.msra.mxu0 %v2052
    %2160 = vmatprep.subr.mxu0 %v2051
    %2161 = vmatpush1.msra.mxu0 %v2050
    %2162 = vmatprep.subr.mxu0 %v2049
    %2163 = vmatpush1.msra.mxu0 %v2048
    %2164 = vmatprep.subr.mxu0 %v2047
    %2165 = vmatpush1.msra.mxu0 %v2046
    %2166 = vmatprep.subr.mxu0 %v2045
    %2167 = vmatpush1.msra.mxu0 %v2044
    %2168 = vmatprep.subr.mxu0 %v2043
    %2169 = vmatpush1.msra.mxu0 %v2042
    %2170 = vmatprep.subr.mxu0 %v2041
    %2171 = vmatpush1.msra.mxu0 %v2040
    %2172 = vmatprep.subr.mxu0 %v2039
    %2173 = vmatpush1.msra.mxu0 %v2038
    %2174 = vmatprep.subr.mxu0 %v2037
    %2175 = vmatpush1.msra.mxu0 %v2036
    %2176 = vmatprep.subr.mxu0 %v2035
    %2177 = vmatpush1.msra.mxu0 %v2034
    %2178 = vmatprep.subr.mxu0 %v2033
    %2179 = vmatpush1.msra.mxu0 %v2032
    %2180 = vmatprep.subr.mxu0 %v2031
    %2181 = vmatpush1.msra.mxu0 %v2030
    %2182 = vmatprep.subr.mxu0 %v2029
    %2183 = vmatpush1.msra.mxu0 %v2028
    %2184 = vmatprep.subr.mxu0 %v2027
    %2185 = vmatpush1.msra.mxu0 %v2026
    %2186 = vmatprep.subr.mxu0 %v2089
    %2187 = vmatpush2.msra.mxu0 %v2088
    %2188 = vmatprep.subr.mxu0 %v2087
    %2189 = vmatpush2.msra.mxu0 %v2086
    %2190 = vmatprep.subr.mxu0 %v2085
    %2191 = vmatpush2.msra.mxu0 %v2084
    %2192 = vmatprep.subr.mxu0 %v2083
    %2193 = vmatpush2.msra.mxu0 %v2082
    %2194 = vmatprep.subr.mxu0 %v2081
    %2195 = vmatpush2.msra.mxu0 %v2080
    %2196 = vmatprep.subr.mxu0 %v2079
    %2197 = vmatpush2.msra.mxu0 %v2078
    %2198 = vmatprep.subr.mxu0 %v2077
    %2199 = vmatpush2.msra.mxu0 %v2076
    %2200 = vmatprep.subr.mxu0 %v2075
    %2201 = vmatpush2.msra.mxu0 %v2074
    %2202 = vmatprep.subr.mxu0 %v2073
    %2203 = vmatpush2.msra.mxu0 %v2072
    %2204 = vmatprep.subr.mxu0 %v2071
    %2205 = vmatpush2.msra.mxu0 %v2070
    %2206 = vmatprep.subr.mxu0 %v2069
    %2207 = vmatpush2.msra.mxu0 %v2068
    %2208 = vmatprep.subr.mxu0 %v2067
    %2209 = vmatpush2.msra.mxu0 %v2066
    %2210 = vmatprep.subr.mxu0 %v2065
    %2211 = vmatpush2.msra.mxu0 %v2064
    %2212 = vmatprep.subr.mxu0 %v2063
    %2213 = vmatpush2.msra.mxu0 %v2062
    %2214 = vmatprep.subr.mxu0 %v2061
    %2215 = vmatpush2.msra.mxu0 %v2060
    %2216 = vmatprep.subr.mxu0 %v2059
    %2217 = vmatpush2.msra.mxu0 %v2058
    %2218 = vmatprep.mubr.f32.mxu0 %v1639
    %2219 = vmatmul.mubr.f32.gmra.mxu0 %v1638
    %v2220 = vpop.f32.mrf.mxu0
    %v2221 = vadd.f32 0.0, %v2220
    %v2222 = vpop.f32.mrf.mxu0
    %v2223 = vadd.f32 0.0, %v2222
    %2224 = vdwg.mxu0
    %2225 = vmatprep.subr.mxu0 %v2121
    %2226 = vmatpush1.msra.mxu0 %v2120
    %2227 = vmatprep.subr.mxu0 %v2119
    %2228 = vmatpush1.msra.mxu0 %v2118
    %2229 = vmatprep.subr.mxu0 %v2117
    %2230 = vmatpush1.msra.mxu0 %v2116
    %2231 = vmatprep.subr.mxu0 %v2115
    %2232 = vmatpush1.msra.mxu0 %v2114
    %2233 = vmatprep.subr.mxu0 %v2113
    %2234 = vmatpush1.msra.mxu0 %v2112
    %2235 = vmatprep.subr.mxu0 %v2111
    %2236 = vmatpush1.msra.mxu0 %v2110
    %2237 = vmatprep.subr.mxu0 %v2109
    %2238 = vmatpush1.msra.mxu0 %v2108
    %2239 = vmatprep.subr.mxu0 %v2107
    %2240 = vmatpush1.msra.mxu0 %v2106
    %2241 = vmatprep.subr.mxu0 %v2105
    %2242 = vmatpush1.msra.mxu0 %v2104
    %2243 = vmatprep.subr.mxu0 %v2103
    %2244 = vmatpush1.msra.mxu0 %v2102
    %2245 = vmatprep.subr.mxu0 %v2101
    %2246 = vmatpush1.msra.mxu0 %v2100
    %2247 = vmatprep.subr.mxu0 %v2099
    %2248 = vmatpush1.msra.mxu0 %v2098
    %2249 = vmatprep.subr.mxu0 %v2097
    %2250 = vmatpush1.msra.mxu0 %v2096
    %2251 = vmatprep.subr.mxu0 %v2095
    %2252 = vmatpush1.msra.mxu0 %v2094
    %2253 = vmatprep.subr.mxu0 %v2093
    %2254 = vmatpush1.msra.mxu0 %v2092
    %2255 = vmatprep.subr.mxu0 %v2091
    %2256 = vmatpush1.msra.mxu0 %v2090
    %2257 = vmatprep.subr.mxu0 %v2153
    %2258 = vmatpush2.msra.mxu0 %v2152
    %2259 = vmatprep.subr.mxu0 %v2151
    %2260 = vmatpush2.msra.mxu0 %v2150
    %2261 = vmatprep.subr.mxu0 %v2149
    %2262 = vmatpush2.msra.mxu0 %v2148
    %2263 = vmatprep.subr.mxu0 %v2147
    %2264 = vmatpush2.msra.mxu0 %v2146
    %2265 = vmatprep.subr.mxu0 %v2145
    %2266 = vmatpush2.msra.mxu0 %v2144
    %2267 = vmatprep.subr.mxu0 %v2143
    %2268 = vmatpush2.msra.mxu0 %v2142
    %2269 = vmatprep.subr.mxu0 %v2141
    %2270 = vmatpush2.msra.mxu0 %v2140
    %2271 = vmatprep.subr.mxu0 %v2139
    %2272 = vmatpush2.msra.mxu0 %v2138
    %2273 = vmatprep.subr.mxu0 %v2137
    %2274 = vmatpush2.msra.mxu0 %v2136
    %2275 = vmatprep.subr.mxu0 %v2135
    %2276 = vmatpush2.msra.mxu0 %v2134
    %2277 = vmatprep.subr.mxu0 %v2133
    %2278 = vmatpush2.msra.mxu0 %v2132
    %2279 = vmatprep.subr.mxu0 %v2131
    %2280 = vmatpush2.msra.mxu0 %v2130
    %2281 = vmatprep.subr.mxu0 %v2129
    %2282 = vmatpush2.msra.mxu0 %v2128
    %2283 = vmatprep.subr.mxu0 %v2127
    %2284 = vmatpush2.msra.mxu0 %v2126
    %2285 = vmatprep.subr.mxu0 %v2125
    %2286 = vmatpush2.msra.mxu0 %v2124
    %2287 = vmatprep.subr.mxu0 %v2123
    %2288 = vmatpush2.msra.mxu0 %v2122
    %2289 = vmatprep.mubr.f32.mxu0 %v2023
    %2290 = vmatmul.mubr.f32.gmra.mxu0 %v2022
    %v2291 = vpop.f32.mrf.mxu0
    %v2292 = vadd.f32 %v2221, %v2291
    %v2293 = vpop.f32.mrf.mxu0
    %v2294 = vadd.f32 %v2223, %v2293
    %2295 = vdwg.mxu0
    %v2296 = vxor.u32 %v2292, 2147483648
    %v2297 = vxor.u32 %v2294, 2147483648
    %v2298 = vmul.f32 %v2296, 1.442695
    %v2299 = vpow.pop %v2298
    %v2300 = vmul.f32 %v2297, 1.442695
    %v2301 = vpow.pop %v2300
    %v2302 = vadd.f32 %v2299, 1.0
    %v2303 = vadd.f32 %v2301, 1.0
    %v2304 = vrcp.pop %v2302
    %v2305 = vmul.f32 1.0, %v2304
    %v2306 = vrcp.pop %v2303
    %v2307 = vmul.f32 1.0, %v2306
    %v2308 = vld [vmem:[%s6] sm:$0xff]
    %v2310 = vcombine.high %v2308, %v2308
    %v2312 = vunpack.c.l.s4 1983009808
    %v2313 = vunpack.c.0.s8 %v2312
    %v2314 = vlaneseq
    %v2315 = vshrl.u32 %v2314, 7
    %v2316 = vsub.s32 %v2313, %v2315
    %v2317 = vrot.slane %v2308, %v2316
    %v2319 = vunpack.c.l.s4 1983009808
    %v2320 = vunpack.c.0.s8 %v2319
    %v2321 = vlaneseq
    %v2322 = vshrl.u32 %v2321, 7
    %v2323 = vsub.s32 %v2320, %v2322
    %v2324 = vrot.slane %v2310, %v2323
    %v2325 = vcombine.high %v2317, %v2317
    %v2326 = vcombine.high %v2324, %v2324
    %v2331 = vmul.f32 %v2305, %v2317
    %v2332 = vmul.f32 %v2307, %v2325
    %v2333 = vmul.f32 %v2305, %v2324
    %v2334 = vmul.f32 %v2307, %v2326
    %2335 = vmatprep.subr.mxu0 0.0
    %2336 = vmatpush1.msra.mxu0 %v727
    %2337 = vmatprep.subr.mxu0 0.0
    %2338 = vmatpush1.msra.mxu0 %v726
    %2339 = vmatprep.subr.mxu0 0.0
    %2340 = vmatpush1.msra.mxu0 %v725
    %2341 = vmatprep.subr.mxu0 0.0
    %2342 = vmatpush1.msra.mxu0 %v724
    %2343 = vmatprep.subr.mxu0 0.0
    %2344 = vmatpush1.msra.mxu0 %v723
    %2345 = vmatprep.subr.mxu0 0.0
    %2346 = vmatpush1.msra.mxu0 %v722
    %2347 = vmatprep.subr.mxu0 0.0
    %2348 = vmatpush1.msra.mxu0 %v721
    %2349 = vmatprep.subr.mxu0 0.0
    %2350 = vmatpush1.msra.mxu0 %v720
    %2351 = vmatprep.subr.mxu0 0.0
    %2352 = vmatpush1.msra.mxu0 %v719
    %2353 = vmatprep.subr.mxu0 0.0
    %2354 = vmatpush1.msra.mxu0 %v718
    %2355 = vmatprep.subr.mxu0 0.0
    %2356 = vmatpush1.msra.mxu0 %v717
    %2357 = vmatprep.subr.mxu0 0.0
    %2358 = vmatpush1.msra.mxu0 %v716
    %2359 = vmatprep.subr.mxu0 0.0
    %2360 = vmatpush1.msra.mxu0 %v715
    %2361 = vmatprep.subr.mxu0 0.0
    %2362 = vmatpush1.msra.mxu0 %v714
    %2363 = vmatprep.subr.mxu0 0.0
    %2364 = vmatpush1.msra.mxu0 %v713
    %2365 = vmatprep.subr.mxu0 0.0
    %2366 = vmatpush1.msra.mxu0 %v712
    %2367 = vmatprep.subr.mxu0 0.0
    %2368 = vmatpush2.msra.mxu0 %v743
    %2369 = vmatprep.subr.mxu0 0.0
    %2370 = vmatpush2.msra.mxu0 %v742
    %2371 = vmatprep.subr.mxu0 0.0
    %2372 = vmatpush2.msra.mxu0 %v741
    %2373 = vmatprep.subr.mxu0 0.0
    %2374 = vmatpush2.msra.mxu0 %v740
    %2375 = vmatprep.subr.mxu0 0.0
    %2376 = vmatpush2.msra.mxu0 %v739
    %2377 = vmatprep.subr.mxu0 0.0
    %2378 = vmatpush2.msra.mxu0 %v738
    %2379 = vmatprep.subr.mxu0 0.0
    %2380 = vmatpush2.msra.mxu0 %v737
    %2381 = vmatprep.subr.mxu0 0.0
    %2382 = vmatpush2.msra.mxu0 %v736
    %2383 = vmatprep.subr.mxu0 0.0
    %2384 = vmatpush2.msra.mxu0 %v735
    %2385 = vmatprep.subr.mxu0 0.0
    %2386 = vmatpush2.msra.mxu0 %v734
    %2387 = vmatprep.subr.mxu0 0.0
    %2388 = vmatpush2.msra.mxu0 %v733
    %2389 = vmatprep.subr.mxu0 0.0
    %2390 = vmatpush2.msra.mxu0 %v732
    %2391 = vmatprep.subr.mxu0 0.0
    %2392 = vmatpush2.msra.mxu0 %v731
    %2393 = vmatprep.subr.mxu0 0.0
    %2394 = vmatpush2.msra.mxu0 %v730
    %2395 = vmatprep.subr.mxu0 0.0
    %2396 = vmatpush2.msra.mxu0 %v729
    %2397 = vmatprep.subr.mxu0 0.0
    %2398 = vmatpush2.msra.mxu0 %v728
    %2399 = vmatprep.mubr.f32.mxu0 %v2332
    %2400 = vmatmul.mubr.f32.gmra.mxu0 %v2331
    %v2401 = vpop.f32.mrf.mxu0
    %v2402 = vadd.f32 0.0, %v2401
    %v2403 = vpop.f32.mrf.mxu0
    %2404 = vdwg.mxu0
    %2405 = vmatprep.subr.mxu0 0.0
    %2406 = vmatpush1.msra.mxu0 %v759
    %2407 = vmatprep.subr.mxu0 0.0
    %2408 = vmatpush1.msra.mxu0 %v758
    %2409 = vmatprep.subr.mxu0 0.0
    %2410 = vmatpush1.msra.mxu0 %v757
    %2411 = vmatprep.subr.mxu0 0.0
    %2412 = vmatpush1.msra.mxu0 %v756
    %2413 = vmatprep.subr.mxu0 0.0
    %2414 = vmatpush1.msra.mxu0 %v755
    %2415 = vmatprep.subr.mxu0 0.0
    %2416 = vmatpush1.msra.mxu0 %v754
    %2417 = vmatprep.subr.mxu0 0.0
    %2418 = vmatpush1.msra.mxu0 %v753
    %2419 = vmatprep.subr.mxu0 0.0
    %2420 = vmatpush1.msra.mxu0 %v752
    %2421 = vmatprep.subr.mxu0 0.0
    %2422 = vmatpush1.msra.mxu0 %v751
    %2423 = vmatprep.subr.mxu0 0.0
    %2424 = vmatpush1.msra.mxu0 %v750
    %2425 = vmatprep.subr.mxu0 0.0
    %2426 = vmatpush1.msra.mxu0 %v749
    %2427 = vmatprep.subr.mxu0 0.0
    %2428 = vmatpush1.msra.mxu0 %v748
    %2429 = vmatprep.subr.mxu0 0.0
    %2430 = vmatpush1.msra.mxu0 %v747
    %2431 = vmatprep.subr.mxu0 0.0
    %2432 = vmatpush1.msra.mxu0 %v746
    %2433 = vmatprep.subr.mxu0 0.0
    %2434 = vmatpush1.msra.mxu0 %v745
    %2435 = vmatprep.subr.mxu0 0.0
    %2436 = vmatpush1.msra.mxu0 %v744
    %2437 = vmatprep.subr.mxu0 0.0
    %2438 = vmatpush2.msra.mxu0 %v775
    %2439 = vmatprep.subr.mxu0 0.0
    %2440 = vmatpush2.msra.mxu0 %v774
    %2441 = vmatprep.subr.mxu0 0.0
    %2442 = vmatpush2.msra.mxu0 %v773
    %2443 = vmatprep.subr.mxu0 0.0
    %2444 = vmatpush2.msra.mxu0 %v772
    %2445 = vmatprep.subr.mxu0 0.0
    %2446 = vmatpush2.msra.mxu0 %v771
    %2447 = vmatprep.subr.mxu0 0.0
    %2448 = vmatpush2.msra.mxu0 %v770
    %2449 = vmatprep.subr.mxu0 0.0
    %2450 = vmatpush2.msra.mxu0 %v769
    %2451 = vmatprep.subr.mxu0 0.0
    %2452 = vmatpush2.msra.mxu0 %v768
    %2453 = vmatprep.subr.mxu0 0.0
    %2454 = vmatpush2.msra.mxu0 %v767
    %2455 = vmatprep.subr.mxu0 0.0
    %2456 = vmatpush2.msra.mxu0 %v766
    %2457 = vmatprep.subr.mxu0 0.0
    %2458 = vmatpush2.msra.mxu0 %v765
    %2459 = vmatprep.subr.mxu0 0.0
    %2460 = vmatpush2.msra.mxu0 %v764
    %2461 = vmatprep.subr.mxu0 0.0
    %2462 = vmatpush2.msra.mxu0 %v763
    %2463 = vmatprep.subr.mxu0 0.0
    %2464 = vmatpush2.msra.mxu0 %v762
    %2465 = vmatprep.subr.mxu0 0.0
    %2466 = vmatpush2.msra.mxu0 %v761
    %2467 = vmatprep.subr.mxu0 0.0
    %2468 = vmatpush2.msra.mxu0 %v760
    %2469 = vmatprep.mubr.f32.mxu0 %v2334
    %2470 = vmatmul.mubr.f32.gmra.mxu0 %v2333
    %v2471 = vpop.f32.mrf.mxu0
    %v2472 = vadd.f32 %v2402, %v2471
    %v2473 = vpop.f32.mrf.mxu0
    %2474 = vdwg.mxu0
    %v2475 = vld [vmem:[#allocation2] sm:$0x1]
    %v2477 = vlaneseq
    %v2478 = vshrl.u32 %v2477, 7
    %v2479 = vsub.s32 0, %v2478
    %v2480 = vrot.slane %v2475, %v2479
    %2481 = vset.pattern.permute.xlu0 0
    %2482 = vperm.xlu0 %2481, %v2480
    %v2483 = vpop.permute.xlu0 %2482
    %v2485 = vmul.f32 %v2483, %v2472
    %v2486 = vadd.f32 %v2485, %v2472
    %v2487 = vld [vmem:[%s7] sm:$0xff]
    %v2488 = vld [vmem:[%s7 + $0x8] sm:$0xff]
    %v2489 = vld [vmem:[%s7 + $0x10] sm:$0xff]
    %v2490 = vld [vmem:[%s7 + $0x18] sm:$0xff]
    %v2491 = vld [vmem:[%s7 + $0x20] sm:$0xff]
    %v2492 = vld [vmem:[%s7 + $0x28] sm:$0xff]
    %v2493 = vld [vmem:[%s7 + $0x30] sm:$0xff]
    %v2494 = vld [vmem:[%s7 + $0x38] sm:$0xff]
    %v2495 = vld [vmem:[%s8] sm:$0x3]
    %v2497 = vlaneseq
    %v2498 = vshrl.u32 %v2497, 7
    %v2499 = vsub.s32 0, %v2498
    %v2500 = vrot.slane %v2495, %v2499
    %v2501 = vlaneseq
    %v2502 = vshrl.u32 %v2501, 7
    %v2503 = vsub.s32 1, %v2502
    %v2504 = vrot.slane %v2495, %v2503
    %v2508 = vsel %vm134, %v2486, 0
    %2510 = vmatprep.subr.mxu0 0.0
    %2511 = vmatpush1.msra.mxu0 0.0
    %2512 = vmatprep.subr.mxu0 0.0
    %2513 = vmatpush1.msra.mxu0 0.0
    %2514 = vmatprep.subr.mxu0 0.0
    %2515 = vmatpush1.msra.mxu0 0.0
    %2516 = vmatprep.subr.mxu0 0.0
    %2517 = vmatpush1.msra.mxu0 0.0
    %2518 = vmatprep.subr.mxu0 0.0
    %2519 = vmatpush1.msra.mxu0 0.0
    %2520 = vmatprep.subr.mxu0 0.0
    %2521 = vmatpush1.msra.mxu0 0.0
    %2522 = vmatprep.subr.mxu0 0.0
    %2523 = vmatpush1.msra.mxu0 0.0
    %2524 = vmatprep.subr.mxu0 0.0
    %2525 = vmatpush1.msra.mxu0 0.0
    %2526 = vmatprep.subr.mxu0 0.0
    %2527 = vmatpush1.msra.mxu0 0.0
    %2528 = vmatprep.subr.mxu0 0.0
    %2529 = vmatpush1.msra.mxu0 0.0
    %2530 = vmatprep.subr.mxu0 0.0
    %2531 = vmatpush1.msra.mxu0 0.0
    %2532 = vmatprep.subr.mxu0 0.0
    %2533 = vmatpush1.msra.mxu0 0.0
    %2534 = vmatprep.subr.mxu0 %v2494
    %2535 = vmatpush1.msra.mxu0 %v2493
    %2536 = vmatprep.subr.mxu0 %v2492
    %2537 = vmatpush1.msra.mxu0 %v2491
    %2538 = vmatprep.subr.mxu0 %v2490
    %2539 = vmatpush1.msra.mxu0 %v2489
    %2540 = vmatprep.subr.mxu0 %v2488
    %2541 = vmatpush1.msra.mxu0 %v2487
    %2542 = vmatprep.subr.mxu0 0.0
    %2543 = vmatpush2.msra.mxu0 0.0
    %2544 = vmatprep.subr.mxu0 0.0
    %2545 = vmatpush2.msra.mxu0 0.0
    %2546 = vmatprep.subr.mxu0 0.0
    %2547 = vmatpush2.msra.mxu0 0.0
    %2548 = vmatprep.subr.mxu0 0.0
    %2549 = vmatpush2.msra.mxu0 0.0
    %2550 = vmatprep.subr.mxu0 0.0
    %2551 = vmatpush2.msra.mxu0 0.0
    %2552 = vmatprep.subr.mxu0 0.0
    %2553 = vmatpush2.msra.mxu0 0.0
    %2554 = vmatprep.subr.mxu0 0.0
    %2555 = vmatpush2.msra.mxu0 0.0
    %2556 = vmatprep.subr.mxu0 0.0
    %2557 = vmatpush2.msra.mxu0 0.0
    %2558 = vmatprep.subr.mxu0 0.0
    %2559 = vmatpush2.msra.mxu0 0.0
    %2560 = vmatprep.subr.mxu0 0.0
    %2561 = vmatpush2.msra.mxu0 0.0
    %2562 = vmatprep.subr.mxu0 0.0
    %2563 = vmatpush2.msra.mxu0 0.0
    %2564 = vmatprep.subr.mxu0 0.0
    %2565 = vmatpush2.msra.mxu0 0.0
    %2566 = vmatprep.subr.mxu0 0.0
    %2567 = vmatpush2.msra.mxu0 0.0
    %2568 = vmatprep.subr.mxu0 0.0
    %2569 = vmatpush2.msra.mxu0 0.0
    %2570 = vmatprep.subr.mxu0 0.0
    %2571 = vmatpush2.msra.mxu0 0.0
    %2572 = vmatprep.subr.mxu0 0.0
    %2573 = vmatpush2.msra.mxu0 0.0
    %2574 = vmatprep.mubr.f32.mxu0 0.0
    %2575 = vmatmul.mubr.f32.gmra.mxu0 %v2508
    %v2576 = vpop.f32.mrf.mxu0
    %v2577 = vadd.f32 %v2500, %v2576
    %v2578 = vpop.f32.mrf.mxu0
    %v2579 = vadd.f32 %v2504, %v2578
    %2580 = vdwg.mxu0
    %v2581 = vxor.u32 %v2577, 2147483648
    %v2582 = vmul.f32 %v2581, 1.442695
    %v2583 = vpow.pop %v2582
    %v2584 = vadd.f32 %v2583, 1.0
    %v2585 = vrcp.pop %v2584
    %v2586 = vmul.f32 1.0, %v2585
    %v2587 = vtanh.pop %v2577
    %2589 = vrot.lane.b32.xlu0 %v2587, 96
    %v2590 = vpop.permute.xlu0 %2589
    %v2592 = vmul.f32 %v2586, %v2590
    %v2593 = vtanh.pop %v2592
    %2595 = vrot.lane.b32.xlu0 %v2593, 64
    %v2596 = vpop.permute.xlu0 %2595
    %v2598 = vmul.f32 %v2586, %v2596
    %v2599 = vtanh.pop %v2579
    %v2600 = vxor.u32 %v2579, 2147483648
    %v2601 = vmul.f32 %v2600, 1.442695
    %v2602 = vpow.pop %v2601
    %v2603 = vadd.f32 %v2602, 1.0
    %v2604 = vrcp.pop %v2603
    %v2605 = vmul.f32 1.0, %v2604
    %2607 = vrot.lane.b32.xlu0 %v2599, 96
    %v2608 = vpop.permute.xlu0 %2607
    %v2610 = vmul.f32 %v2586, %v2608
    %v2611 = vtanh.pop %v2610
    %2613 = vrot.lane.b32.xlu0 %v2611, 64
    %v2614 = vpop.permute.xlu0 %2613
    %v2616 = vmul.f32 %v2605, %v2614
    %2618 = vrot.lane.b32.xlu0 %v2598, 64
    %v2619 = vpop.permute.xlu0 %2618
    %v2621 = vsel %vm134, %v2619, %v2616
    %v2622 = vld [vmem:[%s9] sm:$0xff]
    %v2623 = vld [vmem:[%s9 + $0x8] sm:$0xff]
    %v2624 = vld [vmem:[%s9 + $0x10] sm:$0xff]
    %v2625 = vld [vmem:[%s9 + $0x18] sm:$0xff]
    %v2626 = vld [vmem:[%s9 + $0x20] sm:$0xff]
    %v2627 = vld [vmem:[%s9 + $0x28] sm:$0xff]
    %v2628 = vld [vmem:[%s9 + $0x30] sm:$0xff]
    %v2629 = vld [vmem:[%s9 + $0x38] sm:$0xff]
    %v2630 = vld [vmem:[%s10] sm:$0x1]
    %v2632 = vlaneseq
    %v2633 = vshrl.u32 %v2632, 7
    %v2634 = vsub.s32 0, %v2633
    %v2635 = vrot.slane %v2630, %v2634
    %vm2637 = vcmask 523264
    %v2639 = vsel %vm2637, %v2621, 0
    %2641 = vmatprep.subr.mxu0 0.0
    %2642 = vmatpush1.msra.mxu0 0.0
    %2643 = vmatprep.subr.mxu0 0.0
    %2644 = vmatpush1.msra.mxu0 0.0
    %2645 = vmatprep.subr.mxu0 0.0
    %2646 = vmatpush1.msra.mxu0 0.0
    %2647 = vmatprep.subr.mxu0 0.0
    %2648 = vmatpush1.msra.mxu0 0.0
    %2649 = vmatprep.subr.mxu0 0.0
    %2650 = vmatpush1.msra.mxu0 0.0
    %2651 = vmatprep.subr.mxu0 0.0
    %2652 = vmatpush1.msra.mxu0 0.0
    %2653 = vmatprep.subr.mxu0 0.0
    %2654 = vmatpush1.msra.mxu0 0.0
    %2655 = vmatprep.subr.mxu0 0.0
    %2656 = vmatpush1.msra.mxu0 0.0
    %2657 = vmatprep.subr.mxu0 0.0
    %2658 = vmatpush1.msra.mxu0 %v2629
    %2659 = vmatprep.subr.mxu0 0.0
    %2660 = vmatpush1.msra.mxu0 %v2628
    %2661 = vmatprep.subr.mxu0 0.0
    %2662 = vmatpush1.msra.mxu0 %v2627
    %2663 = vmatprep.subr.mxu0 0.0
    %2664 = vmatpush1.msra.mxu0 %v2626
    %2665 = vmatprep.subr.mxu0 0.0
    %2666 = vmatpush1.msra.mxu0 %v2625
    %2667 = vmatprep.subr.mxu0 0.0
    %2668 = vmatpush1.msra.mxu0 %v2624
    %2669 = vmatprep.subr.mxu0 0.0
    %2670 = vmatpush1.msra.mxu0 %v2623
    %2671 = vmatprep.subr.mxu0 0.0
    %2672 = vmatpush1.msra.mxu0 %v2622
    %2673 = vmatprep.subr.mxu0 0.0
    %2674 = vmatpush2.msra.mxu0 0.0
    %2675 = vmatprep.subr.mxu0 0.0
    %2676 = vmatpush2.msra.mxu0 0.0
    %2677 = vmatprep.subr.mxu0 0.0
    %2678 = vmatpush2.msra.mxu0 0.0
    %2679 = vmatprep.subr.mxu0 0.0
    %2680 = vmatpush2.msra.mxu0 0.0
    %2681 = vmatprep.subr.mxu0 0.0
    %2682 = vmatpush2.msra.mxu0 0.0
    %2683 = vmatprep.subr.mxu0 0.0
    %2684 = vmatpush2.msra.mxu0 0.0
    %2685 = vmatprep.subr.mxu0 0.0
    %2686 = vmatpush2.msra.mxu0 0.0
    %2687 = vmatprep.subr.mxu0 0.0
    %2688 = vmatpush2.msra.mxu0 0.0
    %2689 = vmatprep.subr.mxu0 0.0
    %2690 = vmatpush2.msra.mxu0 0.0
    %2691 = vmatprep.subr.mxu0 0.0
    %2692 = vmatpush2.msra.mxu0 0.0
    %2693 = vmatprep.subr.mxu0 0.0
    %2694 = vmatpush2.msra.mxu0 0.0
    %2695 = vmatprep.subr.mxu0 0.0
    %2696 = vmatpush2.msra.mxu0 0.0
    %2697 = vmatprep.subr.mxu0 0.0
    %2698 = vmatpush2.msra.mxu0 0.0
    %2699 = vmatprep.subr.mxu0 0.0
    %2700 = vmatpush2.msra.mxu0 0.0
    %2701 = vmatprep.subr.mxu0 0.0
    %2702 = vmatpush2.msra.mxu0 0.0
    %2703 = vmatprep.subr.mxu0 0.0
    %2704 = vmatpush2.msra.mxu0 0.0
    %2705 = vmatprep.mubr.f32.mxu0 0.0
    %2706 = vmatmul.mubr.f32.gmra.mxu0 %v2639
    %v2707 = vpop.f32.mrf.mxu0
    %v2708 = vadd.f32 %v2635, %v2707
    %v2709 = vpop.f32.mrf.mxu0
    %2710 = vdwg.mxu0
    %v2711 = vld [vmem:[%s1] sm:$0x3]
    %v2712 = vld [vmem:[%s11] sm:$0x1]
    %2714 = vset.pattern.permute.xlu0 0
    %2715 = vperm.xlu0 %2714, %v2711
    %v2716 = vpop.permute.xlu0 %2715
    %v2718 = vlaneseq
    %v2719 = vshrl.u32 %v2718, 7
    %v2720 = vsub.s32 0, %v2719
    %v2721 = vrot.slane %v2712, %v2720
    %v2722 = vmul.f32 %v2716, %v2721
    %v2723 = vld [vmem:[%s11 + $0x1] sm:$0x1]
    %2724 = vset.pattern.permute.xlu0 1
    %2725 = vperm.xlu0 %2724, %v2711
    %v2726 = vpop.permute.xlu0 %2725
    %v2728 = vlaneseq
    %v2729 = vshrl.u32 %v2728, 7
    %v2730 = vsub.s32 0, %v2729
    %v2731 = vrot.slane %v2723, %v2730
    %v2732 = vmul.f32 %v2726, %v2731
    %v2733 = vadd.f32 %v2722, %v2732
    %v2734 = vld [vmem:[%s12] sm:$0x1]
    %v2736 = vlaneseq
    %v2737 = vshrl.u32 %v2736, 7
    %v2738 = vsub.s32 0, %v2737
    %v2739 = vrot.slane %v2734, %v2738
    %v2741 = vadd.f32 %v2733, %v2739
    %2742 = vrot.lane.b32.xlu0 %v2708, 13
    %v2743 = vpop.permute.xlu0 %2742
    %2745 = vset.pattern.permute.xlu0 0
    %2746 = vperm.xlu0 %2745, %v2741
    %v2747 = vpop.permute.xlu0 %2746
    %v2749 = vmul.f32 %v2747, %v2743
    %2750 = vrot.lane.b32.xlu0 %v2708, 71
    %v2751 = vpop.permute.xlu0 %2750
    %2752 = vset.pattern.permute.xlu0 1
    %2753 = vperm.xlu0 %2752, %v2741
    %v2754 = vpop.permute.xlu0 %2753
    %v2756 = vmul.f32 %v2754, %v2751
    %v2757 = vadd.f32 %v2749, %v2756
    %vm2758 = vcmask 1041408
    %v2759 = vsel %vm2758, %v2757, 0.0
    %v2760 = vrot.slane %v2759, 4
    %v2761 = vadd.f32 %v2759, %v2760
    %v2762 = vrot.slane %v2761, 2
    %v2763 = vadd.f32 %v2761, %v2762
    %v2764 = vrot.slane %v2763, 1
    %v2765 = vadd.f32 %v2763, %v2764
    %v2766 = vrcp.pop 2.0
    %v2767 = vmul.f32 %v2765, %v2766
    %v2768 = vsub.f32 %v2757, %v2767
    %v2769 = vmul.f32 %v2768, %v2768
    %v2770 = vsel %vm2758, %v2769, 0.0
    %v2771 = vrot.slane %v2770, 4
    %v2772 = vadd.f32 %v2770, %v2771
    %v2773 = vrot.slane %v2772, 2
    %v2774 = vadd.f32 %v2772, %v2773
    %v2775 = vrot.slane %v2774, 1
    %v2776 = vadd.f32 %v2774, %v2775
    %v2777 = vmul.f32 %v2776, %v2766
    %v2778 = vadd.f32 %v2777, 1e-05
    %v2779 = vrsqrt.pop %v2778
    %v2780 = vmul.f32 %v2768, %v2779
    %v2781 = vld [vmem:[%s13] sm:$0x1]
    %v2783 = vlaneseq
    %v2784 = vshrl.u32 %v2783, 7
    %v2785 = vsub.s32 0, %v2784
    %v2786 = vrot.slane %v2781, %v2785
    %v2788 = vmul.f32 %v2780, %v2786
    %v2789 = vld [vmem:[%s14] sm:$0x1]
    %v2791 = vlaneseq
    %v2792 = vshrl.u32 %v2791, 7
    %v2793 = vsub.s32 0, %v2792
    %v2794 = vrot.slane %v2789, %v2793
    %v2796 = vadd.f32 %v2788, %v2794
    %v2797 = vmax.f32 %v2796, 0.0
    %v2798 = vld [vmem:[%s15] sm:$0xff]
    %v2799 = vld [vmem:[%s15 + $0x8] sm:$0xff]
    %v2800 = vld [vmem:[%s15 + $0x10] sm:$0xff]
    %v2801 = vld [vmem:[%s15 + $0x18] sm:$0xff]
    %v2802 = vld [vmem:[%s15 + $0x20] sm:$0xff]
    %v2803 = vld [vmem:[%s15 + $0x28] sm:$0xff]
    %v2804 = vld [vmem:[%s15 + $0x30] sm:$0xff]
    %v2805 = vld [vmem:[%s15 + $0x38] sm:$0xff]
    %v2806 = vld [vmem:[%s15 + $0x40] sm:$0xff]
    %v2807 = vld [vmem:[%s15 + $0x48] sm:$0xff]
    %v2808 = vld [vmem:[%s15 + $0x50] sm:$0xff]
    %v2809 = vld [vmem:[%s15 + $0x58] sm:$0xff]
    %v2810 = vld [vmem:[%s15 + $0x60] sm:$0xff]
    %v2811 = vld [vmem:[%s15 + $0x68] sm:$0xff]
    %v2812 = vld [vmem:[%s15 + $0x70] sm:$0xff]
    %v2813 = vld [vmem:[%s15 + $0x78] sm:$0xff]
    %v2814 = vld [vmem:[%s16] sm:$0x1]
    %v2816 = vlaneseq
    %v2817 = vshrl.u32 %v2816, 7
    %v2818 = vsub.s32 0, %v2817
    %v2819 = vrot.slane %v2814, %v2818
    %2821 = vmatprep.subr.mxu0 0.0
    %2822 = vmatpush1.msra.mxu0 %v2813
    %2823 = vmatprep.subr.mxu0 0.0
    %2824 = vmatpush1.msra.mxu0 %v2812
    %2825 = vmatprep.subr.mxu0 0.0
    %2826 = vmatpush1.msra.mxu0 %v2811
    %2827 = vmatprep.subr.mxu0 0.0
    %2828 = vmatpush1.msra.mxu0 %v2810
    %2829 = vmatprep.subr.mxu0 0.0
    %2830 = vmatpush1.msra.mxu0 %v2809
    %2831 = vmatprep.subr.mxu0 0.0
    %2832 = vmatpush1.msra.mxu0 %v2808
    %2833 = vmatprep.subr.mxu0 0.0
    %2834 = vmatpush1.msra.mxu0 %v2807
    %2835 = vmatprep.subr.mxu0 0.0
    %2836 = vmatpush1.msra.mxu0 %v2806
    %2837 = vmatprep.subr.mxu0 0.0
    %2838 = vmatpush1.msra.mxu0 %v2805
    %2839 = vmatprep.subr.mxu0 0.0
    %2840 = vmatpush1.msra.mxu0 %v2804
    %2841 = vmatprep.subr.mxu0 0.0
    %2842 = vmatpush1.msra.mxu0 %v2803
    %2843 = vmatprep.subr.mxu0 0.0
    %2844 = vmatpush1.msra.mxu0 %v2802
    %2845 = vmatprep.subr.mxu0 0.0
    %2846 = vmatpush1.msra.mxu0 %v2801
    %2847 = vmatprep.subr.mxu0 0.0
    %2848 = vmatpush1.msra.mxu0 %v2800
    %2849 = vmatprep.subr.mxu0 0.0
    %2850 = vmatpush1.msra.mxu0 %v2799
    %2851 = vmatprep.subr.mxu0 0.0
    %2852 = vmatpush1.msra.mxu0 %v2798
    %2853 = vmatprep.subr.mxu0 0.0
    %2854 = vmatpush2.msra.mxu0 0.0
    %2855 = vmatprep.subr.mxu0 0.0
    %2856 = vmatpush2.msra.mxu0 0.0
    %2857 = vmatprep.subr.mxu0 0.0
    %2858 = vmatpush2.msra.mxu0 0.0
    %2859 = vmatprep.subr.mxu0 0.0
    %2860 = vmatpush2.msra.mxu0 0.0
    %2861 = vmatprep.subr.mxu0 0.0
    %2862 = vmatpush2.msra.mxu0 0.0
    %2863 = vmatprep.subr.mxu0 0.0
    %2864 = vmatpush2.msra.mxu0 0.0
    %2865 = vmatprep.subr.mxu0 0.0
    %2866 = vmatpush2.msra.mxu0 0.0
    %2867 = vmatprep.subr.mxu0 0.0
    %2868 = vmatpush2.msra.mxu0 0.0
    %2869 = vmatprep.subr.mxu0 0.0
    %2870 = vmatpush2.msra.mxu0 0.0
    %2871 = vmatprep.subr.mxu0 0.0
    %2872 = vmatpush2.msra.mxu0 0.0
    %2873 = vmatprep.subr.mxu0 0.0
    %2874 = vmatpush2.msra.mxu0 0.0
    %2875 = vmatprep.subr.mxu0 0.0
    %2876 = vmatpush2.msra.mxu0 0.0
    %2877 = vmatprep.subr.mxu0 0.0
    %2878 = vmatpush2.msra.mxu0 0.0
    %2879 = vmatprep.subr.mxu0 0.0
    %2880 = vmatpush2.msra.mxu0 0.0
    %2881 = vmatprep.subr.mxu0 0.0
    %2882 = vmatpush2.msra.mxu0 0.0
    %2883 = vmatprep.subr.mxu0 0.0
    %2884 = vmatpush2.msra.mxu0 0.0
    %2885 = vmatprep.mubr.f32.mxu0 0.0
    %2886 = vmatmul.mubr.f32.gmra.mxu0 %v2797
    %v2887 = vpop.f32.mrf.mxu0
    %v2888 = vadd.f32 %v2819, %v2887
    %v2889 = vpop.f32.mrf.mxu0
    %2890 = vdwg.mxu0
    %2891 = vst [vmem:[#allocation3] sm:$0x3] %v2888
    // Predicated region
    $region70: #{_lambda_.1} parent=1 // pred_check
      _
    $region71: #{_lambda_.1} parent=1 // pred_check_branch
      %2893 = sbr.rel (0) target = $region73
    $region72: #{_lambda_.1} parent=1 // pred_region
      %s2895 = ssub.s32 32, 32
      %2896 = vsyncadd [#allocation4], %s2895
      %s2898 = sshll.u32 [#allocation3], 4
      %s2899 = int_to_ptr.vmem [resolvable:$true] %s2898
      %2901 = dma.vmem_to_hbm [thread:$0]  %s2899, 32, %s17, [#allocation4]
    $region73: #{_lambda_.1} parent=1 // pred_fallthru
      _
    // Predicated region
    $region74: #{_lambda_.1} parent=1 // pred_check
      _
    $region75: #{_lambda_.1} parent=1 // pred_check_branch
      %2903 = sbr.rel (0) target = $region77
    $region76: #{_lambda_.1} parent=1 // pred_region
      %2904 = dma.done [#allocation4], 32
    $region77: #{_lambda_.1} parent=1 // pred_fallthru
      _
    %2905 = vsyncpa [#allocation4], 1

</llo_original>
